<compile_context>
chip_gen: v7x
topology: tpu7x:2x2x1
jax: 0.10.0
libtpu: 0.0.40
codegen_flags: <defaults>
</compile_context>

<pallas_src>
import math
import functools

import numpy as np
import jax
import jax.numpy as jnp
from jax import lax
from jax.experimental import pallas as pl
from jax.experimental.pallas import tpu as pltpu


# ----------------------------------------------------------------------------
# Small helpers
# ----------------------------------------------------------------------------

def _sigmoid(v):
    # tanh-based sigmoid: one EUP transcendental + 2 cheap VPU ops, no VALU divide.
    return 0.5 * jnp.tanh(0.5 * v) + 0.5


def _silu(v):
    return v * _sigmoid(v)


def _build_boundary_masks(H, W, KH, KW):
    """(KH*KW, H*W) f32 masks implementing SAME zero-padding for each depthwise tap.

    Built with numpy at trace time (compile-time constants); mask[tap, p] == 1 iff the
    tap's source pixel for destination p lies inside the image.
    """
    P = H * W
    rows = np.arange(P) // W
    cols = np.arange(P) % W
    masks = np.ones((KH * KW, P), np.float32)
    for di in range(-(KH // 2), KH // 2 + 1):
        for dj in range(-(KW // 2), KW // 2 + 1):
            tap = (di + KH // 2) * KW + (dj + KW // 2)
            ok = (rows + di >= 0) & (rows + di < H) & (cols + dj >= 0) & (cols + dj < W)
            masks[tap] = ok.astype(np.float32)
    return masks


def _default_images_per_step(n):
    """How many images one grid step processes.

    v5e/v6e have a single TensorCore: one big step avoids ~0.35us/step overhead.
    v7x has two TensorCores: keep >= 2 "parallel" grid steps so neither TC idles.
    """
    kind = ""
    try:
        kind = jax.devices()[0].device_kind.lower()
    except Exception:
        pass
    if any(t in kind for t in ("v7", "7x")) and n >= 2 and n % 2 == 0:
        return n // 2
    return n


# ----------------------------------------------------------------------------
# Fused kernel body (one grid step = G batch images, stacked on sublanes)
# ----------------------------------------------------------------------------

def _mbconv_kernel(x_ref, masks_ref, w_exp_ref, slab_ref, b_sred_ref,
                   w_proj_ref, bn2b_ref, o_ref, *, H, W, KH, KW, G, skip):
    P = H * W
    KK = KH * KW
    cin = w_exp_ref.shape[1]
    oup = w_exp_ref.shape[0]
    cout = w_proj_ref.shape[0]
    nsq = b_sred_ref.shape[1]
    center = (KH // 2) * KW + (KW // 2)
    inv_P = 1.0 / P

    # slab column layout (per expanded channel):
    #   [0:KK]                 depthwise taps (BN1 scale pre-folded)
    #   [KK]                   BN0 bias
    #   [KK+1]                 BN1 bias
    #   [KK+2 : KK+2+nsq]      SE-reduce weight
    #   [KK+2+nsq : KK+2+2nsq] SE-expand weight (transposed)
    #   [KK+2+2nsq]            SE-expand bias
    c_b0 = KK
    c_b1 = KK + 1
    c_red = KK + 2
    c_exp = KK + 2 + nsq
    c_bse = KK + 2 + 2 * nsq

    for g in range(G):                                     # trace-time unrolled
        xg = x_ref[g * cin:(g + 1) * cin, :]               # (cin, P)

        # ---- expand 1x1 (BN0 scale folded into weight) + BN0 bias + SiLU ----
        h = jnp.dot(w_exp_ref[...], xg, preferred_element_type=jnp.float32)  # (oup, P)
        h = _silu(h + slab_ref[:, c_b0:c_b0 + 1])

        # ---- depthwise KHxKW, stride 1, SAME: lane rotations + baked masks ----
        acc = slab_ref[:, center:center + 1] * h           # centre tap initialises acc
        for di in range(-(KH // 2), KH // 2 + 1):
            for dj in range(-(KW // 2), KW // 2 + 1):
                tap = (di + KH // 2) * KW + (dj + KW // 2)
                if tap == center:
                    continue
                off = di * W + dj                           # source lane = p + off
                src = pltpu.roll(h, (-off) % P, 1)          # XLU lane rotation
                src = src * masks_ref[tap:tap + 1, :]       # SAME zero padding
                acc = acc + slab_ref[:, tap:tap + 1] * src
        h = _silu(acc + slab_ref[:, c_b1:c_b1 + 1])

        # ---- squeeze & excitation (VPU/XLU only, no degenerate MXU matmuls) ----
        s = jnp.sum(h, axis=1, keepdims=True) * inv_P                         # (oup, 1)
        r = jnp.sum(slab_ref[:, c_red:c_red + nsq] * s, axis=0,
                    keepdims=True) + b_sred_ref[...]                          # (1, nsq)
        r = _silu(r)
        e = jnp.sum(slab_ref[:, c_exp:c_exp + nsq] * r, axis=1,
                    keepdims=True) + slab_ref[:, c_bse:c_bse + 1]             # (oup, 1)
        h = h * _sigmoid(e)

        # ---- project 1x1 (BN2 scale folded) + BN2 bias + residual skip ----
        y = jnp.dot(w_proj_ref[...], h, preferred_element_type=jnp.float32)   # (cout, P)
        y = y + bn2b_ref[...]
        if skip:
            y = y + xg
        o_ref[g * cout:(g + 1) * cout, :] = y


# ----------------------------------------------------------------------------
# Wrapper: NCHW in / NCHW out (pure reshapes only, no transposes)
# ----------------------------------------------------------------------------

def mbconv_forward(x_nchw, kp, *, ksize, images_per_step=None):
    n, cin, hh, ww = x_nchw.shape
    p = hh * ww
    oup = kp["w_exp"].shape[0]
    cout = kp["w_proj"].shape[0]
    nsq = kp["b_se_red"].shape[1]
    k = ksize
    kk = k * k
    skip = (cin == cout)   # stride == 1 in this kernel; matches PyTorch skip_connect

    g = images_per_step if images_per_step is not None else _default_images_per_step(n)
    if g < 1 or n % g != 0:
        g = 1
    steps = n // g

    masks = jnp.asarray(_build_boundary_masks(hh, ww, k, k))
    x2 = x_nchw.reshape(n * cin, p).astype(jnp.float32)     # free reshape (row-major)

    kernel = functools.partial(_mbconv_kernel, H=hh, W=ww, KH=k, KW=k, G=g, skip=skip)

    def wspec(a):   # full-array, grid-invariant weight spec (stays VMEM-resident)
        return pl.BlockSpec(a.shape, lambda s: (0, 0))

    weights = [masks, kp["w_exp"], kp["slab"], kp["b_se_red"], kp["w_proj"], kp["bn2_b"]]

    flops = n * (2 * oup * cin * p + 2 * kk * oup * p + 2 * cout * oup * p
                 + 12 * oup * p + 4 * oup * nsq)
    transcendentals = n * (2 * oup * p + oup + nsq)
    bytes_accessed = 4 * (n * cin * p + n * cout * p + sum(int(w.size) for w in weights))

    out2 = pl.pallas_call(
        kernel,
        out_shape=jax.ShapeDtypeStruct((n * cout, p), jnp.float32),
        grid=(steps,),
        in_specs=[pl.BlockSpec((g * cin, p), lambda s: (s, 0))] + [wspec(w) for w in weights],
        out_specs=pl.BlockSpec((g * cout, p), lambda s: (s, 0)),
        compiler_params=pltpu.CompilerParams(dimension_semantics=("parallel",)),
        cost_estimate=pl.CostEstimate(flops=flops, transcendentals=transcendentals,
                                      bytes_accessed=bytes_accessed),
    )(x2, *weights)
    return out2.reshape(n, cout, hh, ww)


# ----------------------------------------------------------------------------
# Parameter construction (PyTorch-like layout) and packing for the kernel
# ----------------------------------------------------------------------------

def make_params(key, cin, expand_ratio, k, nsq, cout, bn_eps=1e-3):
    oup = cin * expand_ratio
    keys = iter(jax.random.split(key, 24))

    def nrm(shape, scale=0.1):
        return (scale * jax.random.normal(next(keys), shape)).astype(jnp.float32)

    def fold_bn(c):
        gamma = 1.0 + nrm((c,), 0.05)
        beta = nrm((c,), 0.05)
        mean = nrm((c,), 0.05)
        var = 0.5 + jnp.abs(nrm((c,), 0.2))
        scale = gamma / jnp.sqrt(var + bn_eps)
        bias = beta - mean * scale
        return scale, bias

    p = {}
    p["w_expand"] = nrm((cin, oup))          # 1x1 conv weight stored as (in, out)
    p["bn0_scale"], p["bn0_bias"] = fold_bn(oup)
    p["w_dw"] = nrm((k, k, oup))             # depthwise weight stored as (kh, kw, C)
    p["bn1_scale"], p["bn1_bias"] = fold_bn(oup)
    p["w_se_red"] = nrm((oup, nsq))
    p["b_se_red"] = nrm((nsq,))
    p["w_se_exp"] = nrm((nsq, oup))
    p["b_se_exp"] = nrm((oup,))
    p["w_project"] = nrm((oup, cout))
    p["bn2_scale"], p["bn2_bias"] = fold_bn(cout)
    return p


def pack_params(p):
    """One-time host-side re-layout: fold BN scales into conv weights and pack the
    per-expanded-channel vectors into one slab (channels-on-sublanes layout)."""
    cin, oup = p["w_expand"].shape
    cout = p["w_project"].shape[1]
    nsq = p["w_se_red"].shape[1]
    k = p["w_dw"].shape[0]
    kk = k * k

    w_exp = (p["w_expand"] * p["bn0_scale"][None, :]).T            # (oup, cin), BN0 folded
    w_dw = p["w_dw"].reshape(kk, oup).T * p["bn1_scale"][:, None]  # (oup, kk),  BN1 folded
    w_proj = (p["w_project"] * p["bn2_scale"][None, :]).T          # (cout, oup), BN2 folded

    slab = jnp.concatenate([
        w_dw,                                   # [0:kk]        depthwise taps
        p["bn0_bias"].reshape(oup, 1),          # [kk]          BN0 bias
        p["bn1_bias"].reshape(oup, 1),          # [kk+1]        BN1 bias
        p["w_se_red"],                          # [kk+2:+nsq]   SE reduce weight
        p["w_se_exp"].T,                        # [...:+nsq]    SE expand weight^T
        p["b_se_exp"].reshape(oup, 1),          # last          SE expand bias
    ], axis=1).astype(jnp.float32)

    return {
        "w_exp": w_exp.astype(jnp.float32),
        "slab": slab,
        "b_se_red": p["b_se_red"].reshape(1, nsq).astype(jnp.float32),
        "w_proj": w_proj.astype(jnp.float32),
        "bn2_b": p["bn2_bias"].reshape(cout, 1).astype(jnp.float32),
    }


# ----------------------------------------------------------------------------
# Pure-JAX reference (independent of kernel implementation)
# ----------------------------------------------------------------------------

def mbconv_reference(x_nchw, params):
    x = jnp.transpose(x_nchw, (0, 2, 3, 1)).astype(jnp.float32)
    silu = lambda v: v * jax.nn.sigmoid(v)
    # expand 1x1 + BN0 + SiLU
    h = jnp.einsum("nhwc,cd->nhwd", x, params["w_expand"])
    h = silu(h * params["bn0_scale"] + params["bn0_bias"])
    # depthwise kxk SAME, stride 1, + BN1 + SiLU
    c = h.shape[-1]
    k = params["w_dw"].shape[0]
    pad = (k - 1) // 2
    w_dw = params["w_dw"][:, :, None, :]      # HWIO with I=1 (feature_group_count=C)
    h = lax.conv_general_dilated(
        h, w_dw, window_strides=(1, 1), padding=((pad, pad), (pad, pad)),
        dimension_numbers=("NHWC", "HWIO", "NHWC"), feature_group_count=c)
    h = silu(h * params["bn1_scale"] + params["bn1_bias"])
    # squeeze & excitation
    s = h.mean(axis=(1, 2))
    s = silu(s @ params["w_se_red"] + params["b_se_red"])
    s = s @ params["w_se_exp"] + params["b_se_exp"]
    h = jax.nn.sigmoid(s)[:, None, None, :] * h
    # project 1x1 + BN2 (+ skip only when shapes allow, matching PyTorch skip_connect)
    y = jnp.einsum("nhwc,cd->nhwd", h, params["w_project"])
    y = y * params["bn2_scale"] + params["bn2_bias"]
    if y.shape[-1] == x.shape[-1]:
        y = y + x
    return jnp.transpose(y, (0, 3, 1, 2))


# ----------------------------------------------------------------------------
# Main
# ----------------------------------------------------------------------------

if __name__ == "__main__":
    # Block config: input_filters=8, expand_ratio=4 (oup=32), kernel=3, stride=1,
    # se_ratio=0.25 (nsq=2), output_filters=8, id_skip=True, image_size=16, batch=2.
    N, CIN, H, W = 2, 8, 16, 16
    EXPAND_RATIO = 4
    KSIZE = 3
    SE_RATIO = 0.25
    COUT = 8
    NSQ = max(1, int(CIN * SE_RATIO))

    key = jax.random.PRNGKey(0)
    kx, kparam = jax.random.split(key)
    x_nchw = jax.random.normal(kx, (N, CIN, H, W), dtype=jnp.float32)
    params = make_params(kparam, CIN, EXPAND_RATIO, KSIZE, NSQ, COUT)
    kernel_params = pack_params(params)

    out = jax.block_until_ready(mbconv_forward(x_nchw, kernel_params, ksize=KSIZE))
    ref = jax.block_until_ready(mbconv_reference(x_nchw, params))

    assert out.shape == (N, COUT, H, W), out.shape
    max_err = float(jnp.max(jnp.abs(out - ref)))
    assert jnp.allclose(out, ref, atol=5e-4, rtol=5e-4), max_err

    print("KERNEL_OK")
</pallas_src>

<mosaic_0001>
module attributes {stable_mosaic.version = 11 : i64} {
  func.func @_mbconv_kernel(%arg0: i32, %arg1: memref<16x256xf32, #tpu.memory_space<vmem>>, %arg2: memref<9x256xf32, #tpu.memory_space<vmem>>, %arg3: memref<32x8xf32, #tpu.memory_space<vmem>>, %arg4: memref<32x16xf32, #tpu.memory_space<vmem>>, %arg5: memref<1x2xf32, #tpu.memory_space<vmem>>, %arg6: memref<8x32xf32, #tpu.memory_space<vmem>>, %arg7: memref<8x1xf32, #tpu.memory_space<vmem>>, %arg8: memref<16x256xf32, #tpu.memory_space<vmem>>) attributes {dimension_semantics = [#tpu.dimension_semantics<parallel>], iteration_bounds = array<i64: 1>, scalar_prefetch = 0 : i64, scratch_operands = 0 : i64, tpu.core_type = #tpu.core_type<tc>, window_params = [{transform_indices = @transform_0, window_bounds = array<i64: 16, 256>}, {pipeline_mode = #tpu.pipeline_mode<synchronous>, transform_indices = @transform_1, window_bounds = array<i64: 9, 256>}, {pipeline_mode = #tpu.pipeline_mode<synchronous>, transform_indices = @transform_2, window_bounds = array<i64: 32, 8>}, {pipeline_mode = #tpu.pipeline_mode<synchronous>, transform_indices = @transform_3, window_bounds = array<i64: 32, 16>}, {pipeline_mode = #tpu.pipeline_mode<synchronous>, transform_indices = @transform_4, window_bounds = array<i64: 1, 2>}, {pipeline_mode = #tpu.pipeline_mode<synchronous>, transform_indices = @transform_5, window_bounds = array<i64: 8, 32>}, {pipeline_mode = #tpu.pipeline_mode<synchronous>, transform_indices = @transform_6, window_bounds = array<i64: 8, 1>}, {transform_indices = @transform_7, window_bounds = array<i64: 16, 256>}]} {
    %c0 = arith.constant 0 : index
    %c0_0 = arith.constant 0 : index
    %0 = vector.load %arg1[%c0, %c0_0] : memref<16x256xf32, #tpu.memory_space<vmem>>, vector<8x256xf32>
    %c0_1 = arith.constant 0 : index
    %c0_2 = arith.constant 0 : index
    %1 = vector.load %arg3[%c0_1, %c0_2] : memref<32x8xf32, #tpu.memory_space<vmem>>, vector<32x8xf32>
    %cst = arith.constant dense<0.000000e+00> : vector<32x256xf32>
    %2 = tpu.matmul %1, %0, %cst {dimension_numbers = #tpu.dot_dimension_numbers<[1], [0], [0], [1], [0, 0, 1, 1], [], []>} : vector<32x8xf32>, vector<8x256xf32>, vector<32x256xf32> -> vector<32x256xf32>
    %c0_3 = arith.constant 0 : index
    %c9 = arith.constant 9 : index
    %3 = vector.load %arg4[%c0_3, %c9] : memref<32x16xf32, #tpu.memory_space<vmem>>, vector<32x1xf32>
    %4 = vector.broadcast %3 : vector<32x1xf32> to vector<32x256xf32>
    %5 = arith.addf %2, %4 : vector<32x256xf32>
    %cst_4 = arith.constant 5.000000e-01 : f32
    %6 = vector.broadcast %cst_4 : f32 to vector<32x256xf32>
    %7 = arith.mulf %6, %5 : vector<32x256xf32>
    %8 = math.tanh %7 : vector<32x256xf32>
    %cst_5 = arith.constant 5.000000e-01 : f32
    %9 = vector.broadcast %cst_5 : f32 to vector<32x256xf32>
    %10 = arith.mulf %9, %8 : vector<32x256xf32>
    %cst_6 = arith.constant 5.000000e-01 : f32
    %11 = vector.broadcast %cst_6 : f32 to vector<32x256xf32>
    %12 = arith.addf %10, %11 : vector<32x256xf32>
    %13 = arith.mulf %5, %12 : vector<32x256xf32>
    %c0_7 = arith.constant 0 : index
    %c4 = arith.constant 4 : index
    %14 = vector.load %arg4[%c0_7, %c4] : memref<32x16xf32, #tpu.memory_space<vmem>>, vector<32x1xf32>
    %15 = vector.broadcast %14 : vector<32x1xf32> to vector<32x256xf32>
    %16 = arith.mulf %15, %13 : vector<32x256xf32>
    %c17_i32 = arith.constant 17 : i32
    %17 = tpu.dynamic_rotate %13 by %c17_i32 dim 1 : vector<32x256xf32>, i32 -> vector<32x256xf32>
    %c0_8 = arith.constant 0 : index
    %c0_9 = arith.constant 0 : index
    %18 = vector.load %arg2[%c0_8, %c0_9] : memref<9x256xf32, #tpu.memory_space<vmem>>, vector<1x256xf32>
    %19 = vector.broadcast %18 : vector<1x256xf32> to vector<32x256xf32>
    %20 = arith.mulf %17, %19 : vector<32x256xf32>
    %c0_10 = arith.constant 0 : index
    %c0_11 = arith.constant 0 : index
    %21 = vector.load %arg4[%c0_10, %c0_11] : memref<32x16xf32, #tpu.memory_space<vmem>>, vector<32x1xf32>
    %22 = vector.broadcast %21 : vector<32x1xf32> to vector<32x256xf32>
    %23 = arith.mulf %22, %20 : vector<32x256xf32>
    %24 = arith.addf %16, %23 : vector<32x256xf32>
    %c16_i32 = arith.constant 16 : i32
    %25 = tpu.dynamic_rotate %13 by %c16_i32 dim 1 : vector<32x256xf32>, i32 -> vector<32x256xf32>
    %c1 = arith.constant 1 : index
    %c0_12 = arith.constant 0 : index
    %26 = vector.load %arg2[%c1, %c0_12] : memref<9x256xf32, #tpu.memory_space<vmem>>, vector<1x256xf32>
    %27 = vector.broadcast %26 : vector<1x256xf32> to vector<32x256xf32>
    %28 = arith.mulf %25, %27 : vector<32x256xf32>
    %c0_13 = arith.constant 0 : index
    %c1_14 = arith.constant 1 : index
    %29 = vector.load %arg4[%c0_13, %c1_14] : memref<32x16xf32, #tpu.memory_space<vmem>>, vector<32x1xf32>
    %30 = vector.broadcast %29 : vector<32x1xf32> to vector<32x256xf32>
    %31 = arith.mulf %30, %28 : vector<32x256xf32>
    %32 = arith.addf %24, %31 : vector<32x256xf32>
    %c15_i32 = arith.constant 15 : i32
    %33 = tpu.dynamic_rotate %13 by %c15_i32 dim 1 : vector<32x256xf32>, i32 -> vector<32x256xf32>
    %c2 = arith.constant 2 : index
    %c0_15 = arith.constant 0 : index
    %34 = vector.load %arg2[%c2, %c0_15] : memref<9x256xf32, #tpu.memory_space<vmem>>, vector<1x256xf32>
    %35 = vector.broadcast %34 : vector<1x256xf32> to vector<32x256xf32>
    %36 = arith.mulf %33, %35 : vector<32x256xf32>
    %c0_16 = arith.constant 0 : index
    %c2_17 = arith.constant 2 : index
    %37 = vector.load %arg4[%c0_16, %c2_17] : memref<32x16xf32, #tpu.memory_space<vmem>>, vector<32x1xf32>
    %38 = vector.broadcast %37 : vector<32x1xf32> to vector<32x256xf32>
    %39 = arith.mulf %38, %36 : vector<32x256xf32>
    %40 = arith.addf %32, %39 : vector<32x256xf32>
    %c1_i32 = arith.constant 1 : i32
    %41 = tpu.dynamic_rotate %13 by %c1_i32 dim 1 : vector<32x256xf32>, i32 -> vector<32x256xf32>
    %c3 = arith.constant 3 : index
    %c0_18 = arith.constant 0 : index
    %42 = vector.load %arg2[%c3, %c0_18] : memref<9x256xf32, #tpu.memory_space<vmem>>, vector<1x256xf32>
    %43 = vector.broadcast %42 : vector<1x256xf32> to vector<32x256xf32>
    %44 = arith.mulf %41, %43 : vector<32x256xf32>
    %c0_19 = arith.constant 0 : index
    %c3_20 = arith.constant 3 : index
    %45 = vector.load %arg4[%c0_19, %c3_20] : memref<32x16xf32, #tpu.memory_space<vmem>>, vector<32x1xf32>
    %46 = vector.broadcast %45 : vector<32x1xf32> to vector<32x256xf32>
    %47 = arith.mulf %46, %44 : vector<32x256xf32>
    %48 = arith.addf %40, %47 : vector<32x256xf32>
    %c255_i32 = arith.constant 255 : i32
    %49 = tpu.dynamic_rotate %13 by %c255_i32 dim 1 : vector<32x256xf32>, i32 -> vector<32x256xf32>
    %c5 = arith.constant 5 : index
    %c0_21 = arith.constant 0 : index
    %50 = vector.load %arg2[%c5, %c0_21] : memref<9x256xf32, #tpu.memory_space<vmem>>, vector<1x256xf32>
    %51 = vector.broadcast %50 : vector<1x256xf32> to vector<32x256xf32>
    %52 = arith.mulf %49, %51 : vector<32x256xf32>
    %c0_22 = arith.constant 0 : index
    %c5_23 = arith.constant 5 : index
    %53 = vector.load %arg4[%c0_22, %c5_23] : memref<32x16xf32, #tpu.memory_space<vmem>>, vector<32x1xf32>
    %54 = vector.broadcast %53 : vector<32x1xf32> to vector<32x256xf32>
    %55 = arith.mulf %54, %52 : vector<32x256xf32>
    %56 = arith.addf %48, %55 : vector<32x256xf32>
    %c241_i32 = arith.constant 241 : i32
    %57 = tpu.dynamic_rotate %13 by %c241_i32 dim 1 : vector<32x256xf32>, i32 -> vector<32x256xf32>
    %c6 = arith.constant 6 : index
    %c0_24 = arith.constant 0 : index
    %58 = vector.load %arg2[%c6, %c0_24] : memref<9x256xf32, #tpu.memory_space<vmem>>, vector<1x256xf32>
    %59 = vector.broadcast %58 : vector<1x256xf32> to vector<32x256xf32>
    %60 = arith.mulf %57, %59 : vector<32x256xf32>
    %c0_25 = arith.constant 0 : index
    %c6_26 = arith.constant 6 : index
    %61 = vector.load %arg4[%c0_25, %c6_26] : memref<32x16xf32, #tpu.memory_space<vmem>>, vector<32x1xf32>
    %62 = vector.broadcast %61 : vector<32x1xf32> to vector<32x256xf32>
    %63 = arith.mulf %62, %60 : vector<32x256xf32>
    %64 = arith.addf %56, %63 : vector<32x256xf32>
    %c240_i32 = arith.constant 240 : i32
    %65 = tpu.dynamic_rotate %13 by %c240_i32 dim 1 : vector<32x256xf32>, i32 -> vector<32x256xf32>
    %c7 = arith.constant 7 : index
    %c0_27 = arith.constant 0 : index
    %66 = vector.load %arg2[%c7, %c0_27] : memref<9x256xf32, #tpu.memory_space<vmem>>, vector<1x256xf32>
    %67 = vector.broadcast %66 : vector<1x256xf32> to vector<32x256xf32>
    %68 = arith.mulf %65, %67 : vector<32x256xf32>
    %c0_28 = arith.constant 0 : index
    %c7_29 = arith.constant 7 : index
    %69 = vector.load %arg4[%c0_28, %c7_29] : memref<32x16xf32, #tpu.memory_space<vmem>>, vector<32x1xf32>
    %70 = vector.broadcast %69 : vector<32x1xf32> to vector<32x256xf32>
    %71 = arith.mulf %70, %68 : vector<32x256xf32>
    %72 = arith.addf %64, %71 : vector<32x256xf32>
    %c239_i32 = arith.constant 239 : i32
    %73 = tpu.dynamic_rotate %13 by %c239_i32 dim 1 : vector<32x256xf32>, i32 -> vector<32x256xf32>
    %c8 = arith.constant 8 : index
    %c0_30 = arith.constant 0 : index
    %74 = vector.load %arg2[%c8, %c0_30] : memref<9x256xf32, #tpu.memory_space<vmem>>, vector<1x256xf32>
    %75 = vector.broadcast %74 : vector<1x256xf32> to vector<32x256xf32>
    %76 = arith.mulf %73, %75 : vector<32x256xf32>
    %c0_31 = arith.constant 0 : index
    %c8_32 = arith.constant 8 : index
    %77 = vector.load %arg4[%c0_31, %c8_32] : memref<32x16xf32, #tpu.memory_space<vmem>>, vector<32x1xf32>
    %78 = vector.broadcast %77 : vector<32x1xf32> to vector<32x256xf32>
    %79 = arith.mulf %78, %76 : vector<32x256xf32>
    %80 = arith.addf %72, %79 : vector<32x256xf32>
    %c0_33 = arith.constant 0 : index
    %c10 = arith.constant 10 : index
    %81 = vector.load %arg4[%c0_33, %c10] : memref<32x16xf32, #tpu.memory_space<vmem>>, vector<32x1xf32>
    %82 = vector.broadcast %81 : vector<32x1xf32> to vector<32x256xf32>
    %83 = arith.addf %80, %82 : vector<32x256xf32>
    %cst_34 = arith.constant 5.000000e-01 : f32
    %84 = vector.broadcast %cst_34 : f32 to vector<32x256xf32>
    %85 = arith.mulf %84, %83 : vector<32x256xf32>
    %86 = math.tanh %85 : vector<32x256xf32>
    %cst_35 = arith.constant 5.000000e-01 : f32
    %87 = vector.broadcast %cst_35 : f32 to vector<32x256xf32>
    %88 = arith.mulf %87, %86 : vector<32x256xf32>
    %cst_36 = arith.constant 5.000000e-01 : f32
    %89 = vector.broadcast %cst_36 : f32 to vector<32x256xf32>
    %90 = arith.addf %88, %89 : vector<32x256xf32>
    %91 = arith.mulf %83, %90 : vector<32x256xf32>
    %cst_37 = arith.constant dense<0.000000e+00> : vector<32xf32>
    %92 = vector.multi_reduction <add>, %91, %cst_37 [1] : vector<32x256xf32> to vector<32xf32>
    %93 = vector.shape_cast %92 : vector<32xf32> to vector<32x1xf32>
    %cst_38 = arith.constant 3.906250e-03 : f32
    %94 = vector.broadcast %cst_38 : f32 to vector<32x1xf32>
    %95 = arith.mulf %93, %94 : vector<32x1xf32>
    %c0_39 = arith.constant 0 : index
    %c11 = arith.constant 11 : index
    %96 = vector.load %arg4[%c0_39, %c11] : memref<32x16xf32, #tpu.memory_space<vmem>>, vector<32x2xf32>
    %97 = vector.broadcast %95 : vector<32x1xf32> to vector<32x2xf32>
    %98 = arith.mulf %96, %97 : vector<32x2xf32>
    %cst_40 = arith.constant dense<0.000000e+00> : vector<2xf32>
    %99 = vector.multi_reduction <add>, %98, %cst_40 [0] : vector<32x2xf32> to vector<2xf32>
    %100 = vector.shape_cast %99 : vector<2xf32> to vector<1x2xf32>
    %c0_41 = arith.constant 0 : index
    %c0_42 = arith.constant 0 : index
    %101 = vector.load %arg5[%c0_41, %c0_42] : memref<1x2xf32, #tpu.memory_space<vmem>>, vector<1x2xf32>
    %102 = arith.addf %100, %101 : vector<1x2xf32>
    %cst_43 = arith.constant 5.000000e-01 : f32
    %103 = vector.broadcast %cst_43 : f32 to vector<1x2xf32>
    %104 = arith.mulf %103, %102 : vector<1x2xf32>
    %105 = math.tanh %104 : vector<1x2xf32>
    %cst_44 = arith.constant 5.000000e-01 : f32
    %106 = vector.broadcast %cst_44 : f32 to vector<1x2xf32>
    %107 = arith.mulf %106, %105 : vector<1x2xf32>
    %cst_45 = arith.constant 5.000000e-01 : f32
    %108 = vector.broadcast %cst_45 : f32 to vector<1x2xf32>
    %109 = arith.addf %107, %108 : vector<1x2xf32>
    %110 = arith.mulf %102, %109 : vector<1x2xf32>
    %c0_46 = arith.constant 0 : index
    %c13 = arith.constant 13 : index
    %111 = vector.load %arg4[%c0_46, %c13] : memref<32x16xf32, #tpu.memory_space<vmem>>, vector<32x2xf32>
    %112 = vector.broadcast %110 : vector<1x2xf32> to vector<32x2xf32>
    %113 = arith.mulf %111, %112 : vector<32x2xf32>
    %cst_47 = arith.constant dense<0.000000e+00> : vector<32xf32>
    %114 = vector.multi_reduction <add>, %113, %cst_47 [1] : vector<32x2xf32> to vector<32xf32>
    %115 = vector.shape_cast %114 : vector<32xf32> to vector<32x1xf32>
    %c0_48 = arith.constant 0 : index
    %c15 = arith.constant 15 : index
    %116 = vector.load %arg4[%c0_48, %c15] : memref<32x16xf32, #tpu.memory_space<vmem>>, vector<32x1xf32>
    %117 = arith.addf %115, %116 : vector<32x1xf32>
    %cst_49 = arith.constant 5.000000e-01 : f32
    %118 = vector.broadcast %cst_49 : f32 to vector<32x1xf32>
    %119 = arith.mulf %118, %117 : vector<32x1xf32>
    %120 = math.tanh %119 : vector<32x1xf32>
    %cst_50 = arith.constant 5.000000e-01 : f32
    %121 = vector.broadcast %cst_50 : f32 to vector<32x1xf32>
    %122 = arith.mulf %121, %120 : vector<32x1xf32>
    %cst_51 = arith.constant 5.000000e-01 : f32
    %123 = vector.broadcast %cst_51 : f32 to vector<32x1xf32>
    %124 = arith.addf %122, %123 : vector<32x1xf32>
    %125 = vector.broadcast %124 : vector<32x1xf32> to vector<32x256xf32>
    %126 = arith.mulf %91, %125 : vector<32x256xf32>
    %c0_52 = arith.constant 0 : index
    %c0_53 = arith.constant 0 : index
    %127 = vector.load %arg6[%c0_52, %c0_53] : memref<8x32xf32, #tpu.memory_space<vmem>>, vector<8x32xf32>
    %cst_54 = arith.constant dense<0.000000e+00> : vector<8x256xf32>
    %128 = tpu.matmul %127, %126, %cst_54 {dimension_numbers = #tpu.dot_dimension_numbers<[1], [0], [0], [1], [0, 0, 1, 1], [], []>} : vector<8x32xf32>, vector<32x256xf32>, vector<8x256xf32> -> vector<8x256xf32>
    %c0_55 = arith.constant 0 : index
    %c0_56 = arith.constant 0 : index
    %129 = vector.load %arg7[%c0_55, %c0_56] : memref<8x1xf32, #tpu.memory_space<vmem>>, vector<8x1xf32>
    %130 = vector.broadcast %129 : vector<8x1xf32> to vector<8x256xf32>
    %131 = arith.addf %128, %130 : vector<8x256xf32>
    %132 = arith.addf %131, %0 : vector<8x256xf32>
    %c0_57 = arith.constant 0 : index
    %c0_58 = arith.constant 0 : index
    %133 = vector.load %arg8[%c0_57, %c0_58] : memref<16x256xf32, #tpu.memory_space<vmem>>, vector<8x256xf32>
    tpu.vector_store %arg8[%c0_57, %c0_58], %132 {strides = array<i32>} : memref<16x256xf32, #tpu.memory_space<vmem>>, vector<8x256xf32>,
    %c8_59 = arith.constant 8 : index
    %c0_60 = arith.constant 0 : index
    %134 = vector.load %arg1[%c8_59, %c0_60] : memref<16x256xf32, #tpu.memory_space<vmem>>, vector<8x256xf32>
    %c0_61 = arith.constant 0 : index
    %c0_62 = arith.constant 0 : index
    %135 = vector.load %arg3[%c0_61, %c0_62] : memref<32x8xf32, #tpu.memory_space<vmem>>, vector<32x8xf32>
    %cst_63 = arith.constant dense<0.000000e+00> : vector<32x256xf32>
    %136 = tpu.matmul %135, %134, %cst_63 {dimension_numbers = #tpu.dot_dimension_numbers<[1], [0], [0], [1], [0, 0, 1, 1], [], []>} : vector<32x8xf32>, vector<8x256xf32>, vector<32x256xf32> -> vector<32x256xf32>
    %c0_64 = arith.constant 0 : index
    %c9_65 = arith.constant 9 : index
    %137 = vector.load %arg4[%c0_64, %c9_65] : memref<32x16xf32, #tpu.memory_space<vmem>>, vector<32x1xf32>
    %138 = vector.broadcast %137 : vector<32x1xf32> to vector<32x256xf32>
    %139 = arith.addf %136, %138 : vector<32x256xf32>
    %cst_66 = arith.constant 5.000000e-01 : f32
    %140 = vector.broadcast %cst_66 : f32 to vector<32x256xf32>
    %141 = arith.mulf %140, %139 : vector<32x256xf32>
    %142 = math.tanh %141 : vector<32x256xf32>
    %cst_67 = arith.constant 5.000000e-01 : f32
    %143 = vector.broadcast %cst_67 : f32 to vector<32x256xf32>
    %144 = arith.mulf %143, %142 : vector<32x256xf32>
    %cst_68 = arith.constant 5.000000e-01 : f32
    %145 = vector.broadcast %cst_68 : f32 to vector<32x256xf32>
    %146 = arith.addf %144, %145 : vector<32x256xf32>
    %147 = arith.mulf %139, %146 : vector<32x256xf32>
    %c0_69 = arith.constant 0 : index
    %c4_70 = arith.constant 4 : index
    %148 = vector.load %arg4[%c0_69, %c4_70] : memref<32x16xf32, #tpu.memory_space<vmem>>, vector<32x1xf32>
    %149 = vector.broadcast %148 : vector<32x1xf32> to vector<32x256xf32>
    %150 = arith.mulf %149, %147 : vector<32x256xf32>
    %c17_i32_71 = arith.constant 17 : i32
    %151 = tpu.dynamic_rotate %147 by %c17_i32_71 dim 1 : vector<32x256xf32>, i32 -> vector<32x256xf32>
    %c0_72 = arith.constant 0 : index
    %c0_73 = arith.constant 0 : index
    %152 = vector.load %arg2[%c0_72, %c0_73] : memref<9x256xf32, #tpu.memory_space<vmem>>, vector<1x256xf32>
    %153 = vector.broadcast %152 : vector<1x256xf32> to vector<32x256xf32>
    %154 = arith.mulf %151, %153 : vector<32x256xf32>
    %c0_74 = arith.constant 0 : index
    %c0_75 = arith.constant 0 : index
    %155 = vector.load %arg4[%c0_74, %c0_75] : memref<32x16xf32, #tpu.memory_space<vmem>>, vector<32x1xf32>
    %156 = vector.broadcast %155 : vector<32x1xf32> to vector<32x256xf32>
    %157 = arith.mulf %156, %154 : vector<32x256xf32>
    %158 = arith.addf %150, %157 : vector<32x256xf32>
    %c16_i32_76 = arith.constant 16 : i32
    %159 = tpu.dynamic_rotate %147 by %c16_i32_76 dim 1 : vector<32x256xf32>, i32 -> vector<32x256xf32>
    %c1_77 = arith.constant 1 : index
    %c0_78 = arith.constant 0 : index
    %160 = vector.load %arg2[%c1_77, %c0_78] : memref<9x256xf32, #tpu.memory_space<vmem>>, vector<1x256xf32>
    %161 = vector.broadcast %160 : vector<1x256xf32> to vector<32x256xf32>
    %162 = arith.mulf %159, %161 : vector<32x256xf32>
    %c0_79 = arith.constant 0 : index
    %c1_80 = arith.constant 1 : index
    %163 = vector.load %arg4[%c0_79, %c1_80] : memref<32x16xf32, #tpu.memory_space<vmem>>, vector<32x1xf32>
    %164 = vector.broadcast %163 : vector<32x1xf32> to vector<32x256xf32>
    %165 = arith.mulf %164, %162 : vector<32x256xf32>
    %166 = arith.addf %158, %165 : vector<32x256xf32>
    %c15_i32_81 = arith.constant 15 : i32
    %167 = tpu.dynamic_rotate %147 by %c15_i32_81 dim 1 : vector<32x256xf32>, i32 -> vector<32x256xf32>
    %c2_82 = arith.constant 2 : index
    %c0_83 = arith.constant 0 : index
    %168 = vector.load %arg2[%c2_82, %c0_83] : memref<9x256xf32, #tpu.memory_space<vmem>>, vector<1x256xf32>
    %169 = vector.broadcast %168 : vector<1x256xf32> to vector<32x256xf32>
    %170 = arith.mulf %167, %169 : vector<32x256xf32>
    %c0_84 = arith.constant 0 : index
    %c2_85 = arith.constant 2 : index
    %171 = vector.load %arg4[%c0_84, %c2_85] : memref<32x16xf32, #tpu.memory_space<vmem>>, vector<32x1xf32>
    %172 = vector.broadcast %171 : vector<32x1xf32> to vector<32x256xf32>
    %173 = arith.mulf %172, %170 : vector<32x256xf32>
    %174 = arith.addf %166, %173 : vector<32x256xf32>
    %c1_i32_86 = arith.constant 1 : i32
    %175 = tpu.dynamic_rotate %147 by %c1_i32_86 dim 1 : vector<32x256xf32>, i32 -> vector<32x256xf32>
    %c3_87 = arith.constant 3 : index
    %c0_88 = arith.constant 0 : index
    %176 = vector.load %arg2[%c3_87, %c0_88] : memref<9x256xf32, #tpu.memory_space<vmem>>, vector<1x256xf32>
    %177 = vector.broadcast %176 : vector<1x256xf32> to vector<32x256xf32>
    %178 = arith.mulf %175, %177 : vector<32x256xf32>
    %c0_89 = arith.constant 0 : index
    %c3_90 = arith.constant 3 : index
    %179 = vector.load %arg4[%c0_89, %c3_90] : memref<32x16xf32, #tpu.memory_space<vmem>>, vector<32x1xf32>
    %180 = vector.broadcast %179 : vector<32x1xf32> to vector<32x256xf32>
    %181 = arith.mulf %180, %178 : vector<32x256xf32>
    %182 = arith.addf %174, %181 : vector<32x256xf32>
    %c255_i32_91 = arith.constant 255 : i32
    %183 = tpu.dynamic_rotate %147 by %c255_i32_91 dim 1 : vector<32x256xf32>, i32 -> vector<32x256xf32>
    %c5_92 = arith.constant 5 : index
    %c0_93 = arith.constant 0 : index
    %184 = vector.load %arg2[%c5_92, %c0_93] : memref<9x256xf32, #tpu.memory_space<vmem>>, vector<1x256xf32>
    %185 = vector.broadcast %184 : vector<1x256xf32> to vector<32x256xf32>
    %186 = arith.mulf %183, %185 : vector<32x256xf32>
    %c0_94 = arith.constant 0 : index
    %c5_95 = arith.constant 5 : index
    %187 = vector.load %arg4[%c0_94, %c5_95] : memref<32x16xf32, #tpu.memory_space<vmem>>, vector<32x1xf32>
    %188 = vector.broadcast %187 : vector<32x1xf32> to vector<32x256xf32>
    %189 = arith.mulf %188, %186 : vector<32x256xf32>
    %190 = arith.addf %182, %189 : vector<32x256xf32>
    %c241_i32_96 = arith.constant 241 : i32
    %191 = tpu.dynamic_rotate %147 by %c241_i32_96 dim 1 : vector<32x256xf32>, i32 -> vector<32x256xf32>
    %c6_97 = arith.constant 6 : index
    %c0_98 = arith.constant 0 : index
    %192 = vector.load %arg2[%c6_97, %c0_98] : memref<9x256xf32, #tpu.memory_space<vmem>>, vector<1x256xf32>
    %193 = vector.broadcast %192 : vector<1x256xf32> to vector<32x256xf32>
    %194 = arith.mulf %191, %193 : vector<32x256xf32>
    %c0_99 = arith.constant 0 : index
    %c6_100 = arith.constant 6 : index
    %195 = vector.load %arg4[%c0_99, %c6_100] : memref<32x16xf32, #tpu.memory_space<vmem>>, vector<32x1xf32>
    %196 = vector.broadcast %195 : vector<32x1xf32> to vector<32x256xf32>
    %197 = arith.mulf %196, %194 : vector<32x256xf32>
    %198 = arith.addf %190, %197 : vector<32x256xf32>
    %c240_i32_101 = arith.constant 240 : i32
    %199 = tpu.dynamic_rotate %147 by %c240_i32_101 dim 1 : vector<32x256xf32>, i32 -> vector<32x256xf32>
    %c7_102 = arith.constant 7 : index
    %c0_103 = arith.constant 0 : index
    %200 = vector.load %arg2[%c7_102, %c0_103] : memref<9x256xf32, #tpu.memory_space<vmem>>, vector<1x256xf32>
    %201 = vector.broadcast %200 : vector<1x256xf32> to vector<32x256xf32>
    %202 = arith.mulf %199, %201 : vector<32x256xf32>
    %c0_104 = arith.constant 0 : index
    %c7_105 = arith.constant 7 : index
    %203 = vector.load %arg4[%c0_104, %c7_105] : memref<32x16xf32, #tpu.memory_space<vmem>>, vector<32x1xf32>
    %204 = vector.broadcast %203 : vector<32x1xf32> to vector<32x256xf32>
    %205 = arith.mulf %204, %202 : vector<32x256xf32>
    %206 = arith.addf %198, %205 : vector<32x256xf32>
    %c239_i32_106 = arith.constant 239 : i32
    %207 = tpu.dynamic_rotate %147 by %c239_i32_106 dim 1 : vector<32x256xf32>, i32 -> vector<32x256xf32>
    %c8_107 = arith.constant 8 : index
    %c0_108 = arith.constant 0 : index
    %208 = vector.load %arg2[%c8_107, %c0_108] : memref<9x256xf32, #tpu.memory_space<vmem>>, vector<1x256xf32>
    %209 = vector.broadcast %208 : vector<1x256xf32> to vector<32x256xf32>
    %210 = arith.mulf %207, %209 : vector<32x256xf32>
    %c0_109 = arith.constant 0 : index
    %c8_110 = arith.constant 8 : index
    %211 = vector.load %arg4[%c0_109, %c8_110] : memref<32x16xf32, #tpu.memory_space<vmem>>, vector<32x1xf32>
    %212 = vector.broadcast %211 : vector<32x1xf32> to vector<32x256xf32>
    %213 = arith.mulf %212, %210 : vector<32x256xf32>
    %214 = arith.addf %206, %213 : vector<32x256xf32>
    %c0_111 = arith.constant 0 : index
    %c10_112 = arith.constant 10 : index
    %215 = vector.load %arg4[%c0_111, %c10_112] : memref<32x16xf32, #tpu.memory_space<vmem>>, vector<32x1xf32>
    %216 = vector.broadcast %215 : vector<32x1xf32> to vector<32x256xf32>
    %217 = arith.addf %214, %216 : vector<32x256xf32>
    %cst_113 = arith.constant 5.000000e-01 : f32
    %218 = vector.broadcast %cst_113 : f32 to vector<32x256xf32>
    %219 = arith.mulf %218, %217 : vector<32x256xf32>
    %220 = math.tanh %219 : vector<32x256xf32>
    %cst_114 = arith.constant 5.000000e-01 : f32
    %221 = vector.broadcast %cst_114 : f32 to vector<32x256xf32>
    %222 = arith.mulf %221, %220 : vector<32x256xf32>
    %cst_115 = arith.constant 5.000000e-01 : f32
    %223 = vector.broadcast %cst_115 : f32 to vector<32x256xf32>
    %224 = arith.addf %222, %223 : vector<32x256xf32>
    %225 = arith.mulf %217, %224 : vector<32x256xf32>
    %cst_116 = arith.constant dense<0.000000e+00> : vector<32xf32>
    %226 = vector.multi_reduction <add>, %225, %cst_116 [1] : vector<32x256xf32> to vector<32xf32>
    %227 = vector.shape_cast %226 : vector<32xf32> to vector<32x1xf32>
    %cst_117 = arith.constant 3.906250e-03 : f32
    %228 = vector.broadcast %cst_117 : f32 to vector<32x1xf32>
    %229 = arith.mulf %227, %228 : vector<32x1xf32>
    %c0_118 = arith.constant 0 : index
    %c11_119 = arith.constant 11 : index
    %230 = vector.load %arg4[%c0_118, %c11_119] : memref<32x16xf32, #tpu.memory_space<vmem>>, vector<32x2xf32>
    %231 = vector.broadcast %229 : vector<32x1xf32> to vector<32x2xf32>
    %232 = arith.mulf %230, %231 : vector<32x2xf32>
    %cst_120 = arith.constant dense<0.000000e+00> : vector<2xf32>
    %233 = vector.multi_reduction <add>, %232, %cst_120 [0] : vector<32x2xf32> to vector<2xf32>
    %234 = vector.shape_cast %233 : vector<2xf32> to vector<1x2xf32>
    %c0_121 = arith.constant 0 : index
    %c0_122 = arith.constant 0 : index
    %235 = vector.load %arg5[%c0_121, %c0_122] : memref<1x2xf32, #tpu.memory_space<vmem>>, vector<1x2xf32>
    %236 = arith.addf %234, %235 : vector<1x2xf32>
    %cst_123 = arith.constant 5.000000e-01 : f32
    %237 = vector.broadcast %cst_123 : f32 to vector<1x2xf32>
    %238 = arith.mulf %237, %236 : vector<1x2xf32>
    %239 = math.tanh %238 : vector<1x2xf32>
    %cst_124 = arith.constant 5.000000e-01 : f32
    %240 = vector.broadcast %cst_124 : f32 to vector<1x2xf32>
    %241 = arith.mulf %240, %239 : vector<1x2xf32>
    %cst_125 = arith.constant 5.000000e-01 : f32
    %242 = vector.broadcast %cst_125 : f32 to vector<1x2xf32>
    %243 = arith.addf %241, %242 : vector<1x2xf32>
    %244 = arith.mulf %236, %243 : vector<1x2xf32>
    %c0_126 = arith.constant 0 : index
    %c13_127 = arith.constant 13 : index
    %245 = vector.load %arg4[%c0_126, %c13_127] : memref<32x16xf32, #tpu.memory_space<vmem>>, vector<32x2xf32>
    %246 = vector.broadcast %244 : vector<1x2xf32> to vector<32x2xf32>
    %247 = arith.mulf %245, %246 : vector<32x2xf32>
    %cst_128 = arith.constant dense<0.000000e+00> : vector<32xf32>
    %248 = vector.multi_reduction <add>, %247, %cst_128 [1] : vector<32x2xf32> to vector<32xf32>
    %249 = vector.shape_cast %248 : vector<32xf32> to vector<32x1xf32>
    %c0_129 = arith.constant 0 : index
    %c15_130 = arith.constant 15 : index
    %250 = vector.load %arg4[%c0_129, %c15_130] : memref<32x16xf32, #tpu.memory_space<vmem>>, vector<32x1xf32>
    %251 = arith.addf %249, %250 : vector<32x1xf32>
    %cst_131 = arith.constant 5.000000e-01 : f32
    %252 = vector.broadcast %cst_131 : f32 to vector<32x1xf32>
    %253 = arith.mulf %252, %251 : vector<32x1xf32>
    %254 = math.tanh %253 : vector<32x1xf32>
    %cst_132 = arith.constant 5.000000e-01 : f32
    %255 = vector.broadcast %cst_132 : f32 to vector<32x1xf32>
    %256 = arith.mulf %255, %254 : vector<32x1xf32>
    %cst_133 = arith.constant 5.000000e-01 : f32
    %257 = vector.broadcast %cst_133 : f32 to vector<32x1xf32>
    %258 = arith.addf %256, %257 : vector<32x1xf32>
    %259 = vector.broadcast %258 : vector<32x1xf32> to vector<32x256xf32>
    %260 = arith.mulf %225, %259 : vector<32x256xf32>
    %c0_134 = arith.constant 0 : index
    %c0_135 = arith.constant 0 : index
    %261 = vector.load %arg6[%c0_134, %c0_135] : memref<8x32xf32, #tpu.memory_space<vmem>>, vector<8x32xf32>
    %cst_136 = arith.constant dense<0.000000e+00> : vector<8x256xf32>
    %262 = tpu.matmul %261, %260, %cst_136 {dimension_numbers = #tpu.dot_dimension_numbers<[1], [0], [0], [1], [0, 0, 1, 1], [], []>} : vector<8x32xf32>, vector<32x256xf32>, vector<8x256xf32> -> vector<8x256xf32>
    %c0_137 = arith.constant 0 : index
    %c0_138 = arith.constant 0 : index
    %263 = vector.load %arg7[%c0_137, %c0_138] : memref<8x1xf32, #tpu.memory_space<vmem>>, vector<8x1xf32>
    %264 = vector.broadcast %263 : vector<8x1xf32> to vector<8x256xf32>
    %265 = arith.addf %262, %264 : vector<8x256xf32>
    %266 = arith.addf %265, %134 : vector<8x256xf32>
    %c8_139 = arith.constant 8 : index
    %c0_140 = arith.constant 0 : index
    %267 = vector.load %arg8[%c8_139, %c0_140] : memref<16x256xf32, #tpu.memory_space<vmem>>, vector<8x256xf32>
    tpu.vector_store %arg8[%c8_139, %c0_140], %266 {strides = array<i32>} : memref<16x256xf32, #tpu.memory_space<vmem>>, vector<8x256xf32>,
    return
  }
  func.func @transform_0(%arg0: i32) -> (i32, i32) {
    %c0_i32 = arith.constant 0 : i32
    %c0_i32_0 = arith.constant 0 : i32
    return %arg0, %c0_i32 : i32, i32
  }
  func.func @transform_1(%arg0: i32) -> (i32, i32) {
    %c0_i32 = arith.constant 0 : i32
    %c0_i32_0 = arith.constant 0 : i32
    %c0_i32_1 = arith.constant 0 : i32
    return %c0_i32, %c0_i32_0 : i32, i32
  }
  func.func @transform_2(%arg0: i32) -> (i32, i32) {
    %c0_i32 = arith.constant 0 : i32
    %c0_i32_0 = arith.constant 0 : i32
    %c0_i32_1 = arith.constant 0 : i32
    return %c0_i32, %c0_i32_0 : i32, i32
  }
  func.func @transform_3(%arg0: i32) -> (i32, i32) {
    %c0_i32 = arith.constant 0 : i32
    %c0_i32_0 = arith.constant 0 : i32
    %c0_i32_1 = arith.constant 0 : i32
    return %c0_i32, %c0_i32_0 : i32, i32
  }
  func.func @transform_4(%arg0: i32) -> (i32, i32) {
    %c0_i32 = arith.constant 0 : i32
    %c0_i32_0 = arith.constant 0 : i32
    %c0_i32_1 = arith.constant 0 : i32
    return %c0_i32, %c0_i32_0 : i32, i32
  }
  func.func @transform_5(%arg0: i32) -> (i32, i32) {
    %c0_i32 = arith.constant 0 : i32
    %c0_i32_0 = arith.constant 0 : i32
    %c0_i32_1 = arith.constant 0 : i32
    return %c0_i32, %c0_i32_0 : i32, i32
  }
  func.func @transform_6(%arg0: i32) -> (i32, i32) {
    %c0_i32 = arith.constant 0 : i32
    %c0_i32_0 = arith.constant 0 : i32
    %c0_i32_1 = arith.constant 0 : i32
    return %c0_i32, %c0_i32_0 : i32, i32
  }
  func.func @transform_7(%arg0: i32) -> (i32, i32) {
    %c0_i32 = arith.constant 0 : i32
    %c0_i32_0 = arith.constant 0 : i32
    return %arg0, %c0_i32 : i32, i32
  }
}

</mosaic_0001>

<llo_original>
// kernel: tpu_custom_call.1
$region0: #{tpu_custom_call.1}
  #allocation0 [shape = 'u32[]', space=smem, size = 0x4, offset = 0x4, fixed_abs, tag = 'smem constant byte address 0x4 - core index']
  #allocation1 [shape = 'u32[144,128]{1,0:T(1,128)}', space=vmem, size = 0x12000, scoped, tag = 'internal scratch']
  %s0 = inlined_call_operand.vmem [shape: f32[16,256], index: 0, kind: input, shape index: {}]
  %s1 = inlined_call_operand.vmem [shape: f32[9,256], index: 1, kind: input, shape index: {}]
  %s2 = inlined_call_operand.vmem [shape: f32[32,8], index: 2, kind: input, shape index: {}]
  %s3 = inlined_call_operand.vmem [shape: f32[32,16], index: 3, kind: input, shape index: {}]
  %s4 = inlined_call_operand.vmem [shape: f32[1,2], index: 4, kind: input, shape index: {}]
  %s5 = inlined_call_operand.vmem [shape: f32[8,32], index: 5, kind: input, shape index: {}]
  %s6 = inlined_call_operand.vmem [shape: f32[8,1], index: 6, kind: input, shape index: {}]
  %s7 = inlined_call_operand.hbm [shape: f32[16,256], index: 7, kind: output, shape index: {}]
  %s8 = sld [smem:[#allocation0]]
  $region38: #{tpu_custom_call.1} parent=0
    _
  %s10 = ssub.s32 1, %s8
  %s11 = scalar_select 0, %s10, %s8
  $region1: #{tpu_custom_call.1} parent=0
    #allocation2 [shape = 'u8[16384]{0}', space=vmem, size = 0x4000, scoped, tag = 'output window, operand 0, single buffered']
    #allocation3 [shape = 's32[1]{0}', space=sflag, size = 0x4, scoped, tag = 'scoped memory for tpu_custom_call.1']
    %12 = vsyncpa [#allocation3], 0
    // Predicated region
    $region2: #{tpu_custom_call.1} parent=1 // pred_check
      _
    $region3: #{tpu_custom_call.1} parent=1 // pred_check_branch
      %14 = sbr.rel (0) target = $region5
    $region4: #{tpu_custom_call.1} parent=1 // pred_region
      _
    $region5: #{tpu_custom_call.1} parent=1 // pred_fallthru
      _
    // Predicated region
    $region6: #{tpu_custom_call.1} parent=1 // pred_check
      _
    $region7: #{tpu_custom_call.1} parent=1 // pred_check_branch
      %16 = sbr.rel (0) target = $region9
    $region8: #{tpu_custom_call.1} parent=1 // pred_region
      _
    $region9: #{tpu_custom_call.1} parent=1 // pred_fallthru
      _
    // Predicated region
    $region10: #{tpu_custom_call.1} parent=1 // pred_check
      _
    $region11: #{tpu_custom_call.1} parent=1 // pred_check_branch
      %18 = sbr.rel (0) target = $region13
    $region12: #{tpu_custom_call.1} parent=1 // pred_region
      _
    $region13: #{tpu_custom_call.1} parent=1 // pred_fallthru
      _
    // Predicated region
    $region14: #{tpu_custom_call.1} parent=1 // pred_check
      _
    $region15: #{tpu_custom_call.1} parent=1 // pred_check_branch
      %20 = sbr.rel (0) target = $region17
    $region16: #{tpu_custom_call.1} parent=1 // pred_region
      _
    $region17: #{tpu_custom_call.1} parent=1 // pred_fallthru
      _
    // Predicated region
    $region18: #{tpu_custom_call.1} parent=1 // pred_check
      _
    $region19: #{tpu_custom_call.1} parent=1 // pred_check_branch
      %22 = sbr.rel (0) target = $region21
    $region20: #{tpu_custom_call.1} parent=1 // pred_region
      _
    $region21: #{tpu_custom_call.1} parent=1 // pred_fallthru
      _
    // Predicated region
    $region22: #{tpu_custom_call.1} parent=1 // pred_check
      _
    $region23: #{tpu_custom_call.1} parent=1 // pred_check_branch
      %24 = sbr.rel (0) target = $region25
    $region24: #{tpu_custom_call.1} parent=1 // pred_region
      _
    $region25: #{tpu_custom_call.1} parent=1 // pred_fallthru
      _
    // Predicated region
    $region26: #{tpu_custom_call.1} parent=1 // pred_check
      _
    $region27: #{tpu_custom_call.1} parent=1 // pred_check_branch
      %26 = sbr.rel (0) target = $region29
    $region28: #{tpu_custom_call.1} parent=1 // pred_region
      _
    $region29: #{tpu_custom_call.1} parent=1 // pred_fallthru
      _
    %v27 = vld [vmem:[%s0] sm:$0xff]
    %v28 = vld [vmem:[%s0 + $0x8] sm:$0xff]
    %v29 = vld [vmem:[%s2] sm:$0xff]
    %v30 = vld [vmem:[%s2 + $0x8] sm:$0xff]
    %v31 = vld [vmem:[%s2 + $0x10] sm:$0xff]
    %v32 = vld [vmem:[%s2 + $0x18] sm:$0xff]
    %v33 = vld [vmem:[%s3] sm:$0xff]
    %v34 = vld [vmem:[%s3 + $0x8] sm:$0xff]
    %v35 = vld [vmem:[%s3 + $0x10] sm:$0xff]
    %v36 = vld [vmem:[%s3 + $0x18] sm:$0xff]
    %38 = vset.pattern.permute.xlu0 9
    %39 = vperm.xlu0 %38, %v33
    %v40 = vpop.permute.xlu0 %39
    %43 = vset.pattern.permute.xlu0 9
    %44 = vperm.xlu0 %43, %v34
    %v45 = vpop.permute.xlu0 %44
    %48 = vset.pattern.permute.xlu0 9
    %49 = vperm.xlu0 %48, %v35
    %v50 = vpop.permute.xlu0 %49
    %53 = vset.pattern.permute.xlu0 9
    %54 = vperm.xlu0 %53, %v36
    %v55 = vpop.permute.xlu0 %54
    %vm57 = vcmask 64512
    %v59 = vsel %vm57, %v29, 0
    %v62 = vsel %vm57, %v30, 0
    %v65 = vsel %vm57, %v31, 0
    %v68 = vsel %vm57, %v32, 0
    %70 = vmatprep.subr.mxu0 %v28
    %71 = vmatpush1.msra.mxu0 %v27
    %72 = vmatprep.subr.mxu0 0.0
    %73 = vmatpush1.msra.mxu0 0.0
    %74 = vmatprep.subr.mxu0 0.0
    %75 = vmatpush1.msra.mxu0 0.0
    %76 = vmatprep.subr.mxu0 0.0
    %77 = vmatpush1.msra.mxu0 0.0
    %78 = vmatprep.subr.mxu0 0.0
    %79 = vmatpush1.msra.mxu0 0.0
    %80 = vmatprep.subr.mxu0 0.0
    %81 = vmatpush1.msra.mxu0 0.0
    %82 = vmatprep.subr.mxu0 0.0
    %83 = vmatpush1.msra.mxu0 0.0
    %84 = vmatprep.subr.mxu0 0.0
    %85 = vmatpush1.msra.mxu0 0.0
    %86 = vmatprep.subr.mxu0 0.0
    %87 = vmatpush1.msra.mxu0 0.0
    %88 = vmatprep.subr.mxu0 0.0
    %89 = vmatpush1.msra.mxu0 0.0
    %90 = vmatprep.subr.mxu0 0.0
    %91 = vmatpush1.msra.mxu0 0.0
    %92 = vmatprep.subr.mxu0 0.0
    %93 = vmatpush1.msra.mxu0 0.0
    %94 = vmatprep.subr.mxu0 0.0
    %95 = vmatpush1.msra.mxu0 0.0
    %96 = vmatprep.subr.mxu0 0.0
    %97 = vmatpush1.msra.mxu0 0.0
    %98 = vmatprep.subr.mxu0 0.0
    %99 = vmatpush1.msra.mxu0 0.0
    %100 = vmatprep.subr.mxu0 0.0
    %101 = vmatpush1.msra.mxu0 0.0
    %102 = vmatprep.subr.mxu0 0.0
    %103 = vmatpush1.msra.mxu0 0.0
    %104 = vmatprep.subr.mxu0 0.0
    %105 = vmatpush1.msra.mxu0 0.0
    %106 = vmatprep.subr.mxu0 0.0
    %107 = vmatpush1.msra.mxu0 0.0
    %108 = vmatprep.subr.mxu0 0.0
    %109 = vmatpush1.msra.mxu0 0.0
    %110 = vmatprep.subr.mxu0 0.0
    %111 = vmatpush1.msra.mxu0 0.0
    %112 = vmatprep.subr.mxu0 0.0
    %113 = vmatpush1.msra.mxu0 0.0
    %114 = vmatprep.subr.mxu0 0.0
    %115 = vmatpush1.msra.mxu0 0.0
    %116 = vmatprep.subr.mxu0 0.0
    %117 = vmatpush1.msra.mxu0 0.0
    %118 = vmatprep.subr.mxu0 0.0
    %119 = vmatpush1.msra.mxu0 0.0
    %120 = vmatprep.subr.mxu0 0.0
    %121 = vmatpush1.msra.mxu0 0.0
    %122 = vmatprep.subr.mxu0 0.0
    %123 = vmatpush1.msra.mxu0 0.0
    %124 = vmatprep.subr.mxu0 0.0
    %125 = vmatpush1.msra.mxu0 0.0
    %126 = vmatprep.subr.mxu0 0.0
    %127 = vmatpush1.msra.mxu0 0.0
    %128 = vmatprep.subr.mxu0 0.0
    %129 = vmatpush1.msra.mxu0 0.0
    %130 = vmatprep.subr.mxu0 0.0
    %131 = vmatpush1.msra.mxu0 0.0
    %132 = vmatprep.subr.mxu0 0.0
    %133 = vmatpush1.msra.mxu0 0.0
    %134 = vmatprep.mubr.f32.mxu0 0.0
    %135 = vmatmul.mubr.f32.gmra.mrb[0].mxu0 %v59
    %v136 = vpop.f32.mrb[0].mxu0
    %v137 = vadd.f32 %v40, %v136
    %v138 = vpop.f32.mrb[0].mxu0
    %v139 = vadd.f32 %v40, %v138
    %140 = vmatprep.mubr.f32.mxu0 0.0
    %141 = vmatmul.mubr.f32.gmra.mrb[0].mxu0 %v62
    %v142 = vpop.f32.mrb[0].mxu0
    %v143 = vadd.f32 %v45, %v142
    %v144 = vpop.f32.mrb[0].mxu0
    %v145 = vadd.f32 %v45, %v144
    %146 = vmatprep.mubr.f32.mxu0 0.0
    %147 = vmatmul.mubr.f32.gmra.mrb[0].mxu0 %v65
    %v148 = vpop.f32.mrb[0].mxu0
    %v149 = vadd.f32 %v50, %v148
    %v150 = vpop.f32.mrb[0].mxu0
    %v151 = vadd.f32 %v50, %v150
    %152 = vmatprep.mubr.f32.mxu0 0.0
    %153 = vmatmul.mubr.f32.gmra.mrb[0].mxu0 %v68
    %v154 = vpop.f32.mrb[0].mxu0
    %v155 = vadd.f32 %v55, %v154
    %v156 = vpop.f32.mrb[0].mxu0
    %v157 = vadd.f32 %v55, %v156
    %158 = vdwg.mxu0
    %v159 = vmul.f32 %v137, 0.5
    %v160 = vmul.f32 %v139, 0.5
    %v161 = vmul.f32 %v143, 0.5
    %v162 = vmul.f32 %v145, 0.5
    %v163 = vmul.f32 %v149, 0.5
    %v164 = vmul.f32 %v151, 0.5
    %v165 = vmul.f32 %v155, 0.5
    %v166 = vmul.f32 %v157, 0.5
    %v167 = vtanh.pop %v159
    %v168 = vtanh.pop %v160
    %v169 = vtanh.pop %v161
    %v170 = vtanh.pop %v162
    %v171 = vtanh.pop %v163
    %v172 = vtanh.pop %v164
    %v173 = vtanh.pop %v165
    %v174 = vtanh.pop %v166
    %v175 = vmul.f32 %v167, 0.5
    %v176 = vmul.f32 %v168, 0.5
    %v177 = vmul.f32 %v169, 0.5
    %v178 = vmul.f32 %v170, 0.5
    %v179 = vmul.f32 %v171, 0.5
    %v180 = vmul.f32 %v172, 0.5
    %v181 = vmul.f32 %v173, 0.5
    %v182 = vmul.f32 %v174, 0.5
    %v183 = vadd.f32 %v175, 0.5
    %v184 = vadd.f32 %v176, 0.5
    %v185 = vadd.f32 %v177, 0.5
    %v186 = vadd.f32 %v178, 0.5
    %v187 = vadd.f32 %v179, 0.5
    %v188 = vadd.f32 %v180, 0.5
    %v189 = vadd.f32 %v181, 0.5
    %v190 = vadd.f32 %v182, 0.5
    %v191 = vmul.f32 %v137, %v183
    %v192 = vmul.f32 %v139, %v184
    %v193 = vmul.f32 %v143, %v185
    %v194 = vmul.f32 %v145, %v186
    %v195 = vmul.f32 %v149, %v187
    %v196 = vmul.f32 %v151, %v188
    %v197 = vmul.f32 %v155, %v189
    %v198 = vmul.f32 %v157, %v190
    %199 = vset.pattern.permute.xlu0 4
    %200 = vperm.xlu0 %199, %v33
    %v201 = vpop.permute.xlu0 %200
    %203 = vset.pattern.permute.xlu0 4
    %204 = vperm.xlu0 %203, %v34
    %v205 = vpop.permute.xlu0 %204
    %207 = vset.pattern.permute.xlu0 4
    %208 = vperm.xlu0 %207, %v35
    %v209 = vpop.permute.xlu0 %208
    %211 = vset.pattern.permute.xlu0 4
    %212 = vperm.xlu0 %211, %v36
    %v213 = vpop.permute.xlu0 %212
    %v215 = vmul.f32 %v201, %v191
    %v216 = vmul.f32 %v201, %v192
    %v217 = vmul.f32 %v205, %v193
    %v218 = vmul.f32 %v205, %v194
    %v219 = vmul.f32 %v209, %v195
    %v220 = vmul.f32 %v209, %v196
    %v221 = vmul.f32 %v213, %v197
    %v222 = vmul.f32 %v213, %v198
    %223 = vrot.lane.b32.xlu0 %v191, 17
    %v224 = vpop.permute.xlu0 %223
    %225 = vrot.lane.b32.xlu0 %v193, 17
    %v226 = vpop.permute.xlu0 %225
    %227 = vrot.lane.b32.xlu0 %v195, 17
    %v228 = vpop.permute.xlu0 %227
    %229 = vrot.lane.b32.xlu0 %v197, 17
    %v230 = vpop.permute.xlu0 %229
    %231 = vrot.lane.b32.xlu0 %v192, 17
    %v232 = vpop.permute.xlu0 %231
    %233 = vrot.lane.b32.xlu0 %v194, 17
    %v234 = vpop.permute.xlu0 %233
    %235 = vrot.lane.b32.xlu0 %v196, 17
    %v236 = vpop.permute.xlu0 %235
    %237 = vrot.lane.b32.xlu0 %v198, 17
    %v238 = vpop.permute.xlu0 %237
    %v239 = vlaneseq
    %v240 = vand.u32 %v239, 127
    %vm241 = vcmp.lt.s32.totalorder %v240, 17
    %v242 = vsel %vm241, %v224, %v232
    %v243 = vsel %vm241, %v226, %v234
    %v244 = vsel %vm241, %v228, %v236
    %v245 = vsel %vm241, %v230, %v238
    %v246 = vsel %vm241, %v232, %v224
    %v247 = vsel %vm241, %v234, %v226
    %v248 = vsel %vm241, %v236, %v228
    %v249 = vsel %vm241, %v238, %v230
    %v250 = vld [vmem:[%s1] ss:$8 sm:$0x3]
    %v252 = vlaneseq
    %v253 = vshrl.u32 %v252, 7
    %v254 = vsub.s32 0, %v253
    %v255 = vrot.slane %v250, %v254
    %v256 = vlaneseq
    %v257 = vshrl.u32 %v256, 7
    %v258 = vsub.s32 1, %v257
    %v259 = vrot.slane %v250, %v258
    %v262 = vmul.f32 %v246, %v255
    %v263 = vmul.f32 %v242, %v259
    %v264 = vmul.f32 %v247, %v255
    %v265 = vmul.f32 %v243, %v259
    %v266 = vmul.f32 %v248, %v255
    %v267 = vmul.f32 %v244, %v259
    %v268 = vmul.f32 %v249, %v255
    %v269 = vmul.f32 %v245, %v259
    %270 = vset.pattern.permute.xlu0 0
    %271 = vperm.xlu0 %270, %v33
    %v272 = vpop.permute.xlu0 %271
    %274 = vset.pattern.permute.xlu0 0
    %275 = vperm.xlu0 %274, %v34
    %v276 = vpop.permute.xlu0 %275
    %278 = vset.pattern.permute.xlu0 0
    %279 = vperm.xlu0 %278, %v35
    %v280 = vpop.permute.xlu0 %279
    %282 = vset.pattern.permute.xlu0 0
    %283 = vperm.xlu0 %282, %v36
    %v284 = vpop.permute.xlu0 %283
    %v286 = vmul.f32 %v272, %v262
    %v287 = vmul.f32 %v272, %v263
    %v288 = vmul.f32 %v276, %v264
    %v289 = vmul.f32 %v276, %v265
    %v290 = vmul.f32 %v280, %v266
    %v291 = vmul.f32 %v280, %v267
    %v292 = vmul.f32 %v284, %v268
    %v293 = vmul.f32 %v284, %v269
    %v294 = vadd.f32 %v215, %v286
    %v295 = vadd.f32 %v216, %v287
    %v296 = vadd.f32 %v217, %v288
    %v297 = vadd.f32 %v218, %v289
    %v298 = vadd.f32 %v219, %v290
    %v299 = vadd.f32 %v220, %v291
    %v300 = vadd.f32 %v221, %v292
    %v301 = vadd.f32 %v222, %v293
    %302 = vrot.lane.b32.xlu0 %v191, 16
    %v303 = vpop.permute.xlu0 %302
    %304 = vrot.lane.b32.xlu0 %v193, 16
    %v305 = vpop.permute.xlu0 %304
    %306 = vrot.lane.b32.xlu0 %v195, 16
    %v307 = vpop.permute.xlu0 %306
    %308 = vrot.lane.b32.xlu0 %v197, 16
    %v309 = vpop.permute.xlu0 %308
    %310 = vrot.lane.b32.xlu0 %v192, 16
    %v311 = vpop.permute.xlu0 %310
    %312 = vrot.lane.b32.xlu0 %v194, 16
    %v313 = vpop.permute.xlu0 %312
    %314 = vrot.lane.b32.xlu0 %v196, 16
    %v315 = vpop.permute.xlu0 %314
    %316 = vrot.lane.b32.xlu0 %v198, 16
    %v317 = vpop.permute.xlu0 %316
    %vm318 = vcmp.lt.s32.totalorder %v240, 16
    %v319 = vsel %vm318, %v303, %v311
    %v320 = vsel %vm318, %v305, %v313
    %v321 = vsel %vm318, %v307, %v315
    %v322 = vsel %vm318, %v309, %v317
    %v323 = vsel %vm318, %v311, %v303
    %v324 = vsel %vm318, %v313, %v305
    %v325 = vsel %vm318, %v315, %v307
    %v326 = vsel %vm318, %v317, %v309
    %s327 = scalar_lea.vmem %s1, 1
    %v328 = vld [vmem:[%s327] ss:$8 sm:$0x3]
    %v330 = vlaneseq
    %v331 = vshrl.u32 %v330, 7
    %v332 = vsub.s32 0, %v331
    %v333 = vrot.slane %v328, %v332
    %v334 = vlaneseq
    %v335 = vshrl.u32 %v334, 7
    %v336 = vsub.s32 1, %v335
    %v337 = vrot.slane %v328, %v336
    %v340 = vmul.f32 %v323, %v333
    %v341 = vmul.f32 %v319, %v337
    %v342 = vmul.f32 %v324, %v333
    %v343 = vmul.f32 %v320, %v337
    %v344 = vmul.f32 %v325, %v333
    %v345 = vmul.f32 %v321, %v337
    %v346 = vmul.f32 %v326, %v333
    %v347 = vmul.f32 %v322, %v337
    %348 = vset.pattern.permute.xlu0 1
    %349 = vperm.xlu0 %348, %v33
    %v350 = vpop.permute.xlu0 %349
    %352 = vset.pattern.permute.xlu0 1
    %353 = vperm.xlu0 %352, %v34
    %v354 = vpop.permute.xlu0 %353
    %356 = vset.pattern.permute.xlu0 1
    %357 = vperm.xlu0 %356, %v35
    %v358 = vpop.permute.xlu0 %357
    %360 = vset.pattern.permute.xlu0 1
    %361 = vperm.xlu0 %360, %v36
    %v362 = vpop.permute.xlu0 %361
    %v364 = vmul.f32 %v350, %v340
    %v365 = vmul.f32 %v350, %v341
    %v366 = vmul.f32 %v354, %v342
    %v367 = vmul.f32 %v354, %v343
    %v368 = vmul.f32 %v358, %v344
    %v369 = vmul.f32 %v358, %v345
    %v370 = vmul.f32 %v362, %v346
    %v371 = vmul.f32 %v362, %v347
    %v372 = vadd.f32 %v294, %v364
    %v373 = vadd.f32 %v295, %v365
    %v374 = vadd.f32 %v296, %v366
    %v375 = vadd.f32 %v297, %v367
    %v376 = vadd.f32 %v298, %v368
    %v377 = vadd.f32 %v299, %v369
    %v378 = vadd.f32 %v300, %v370
    %v379 = vadd.f32 %v301, %v371
    %380 = vrot.lane.b32.xlu0 %v191, 15
    %v381 = vpop.permute.xlu0 %380
    %382 = vrot.lane.b32.xlu0 %v193, 15
    %v383 = vpop.permute.xlu0 %382
    %384 = vrot.lane.b32.xlu0 %v195, 15
    %v385 = vpop.permute.xlu0 %384
    %386 = vrot.lane.b32.xlu0 %v197, 15
    %v387 = vpop.permute.xlu0 %386
    %388 = vrot.lane.b32.xlu0 %v192, 15
    %v389 = vpop.permute.xlu0 %388
    %390 = vrot.lane.b32.xlu0 %v194, 15
    %v391 = vpop.permute.xlu0 %390
    %392 = vrot.lane.b32.xlu0 %v196, 15
    %v393 = vpop.permute.xlu0 %392
    %394 = vrot.lane.b32.xlu0 %v198, 15
    %v395 = vpop.permute.xlu0 %394
    %vm396 = vcmp.lt.s32.totalorder %v240, 15
    %v397 = vsel %vm396, %v381, %v389
    %v398 = vsel %vm396, %v383, %v391
    %v399 = vsel %vm396, %v385, %v393
    %v400 = vsel %vm396, %v387, %v395
    %v401 = vsel %vm396, %v389, %v381
    %v402 = vsel %vm396, %v391, %v383
    %v403 = vsel %vm396, %v393, %v385
    %v404 = vsel %vm396, %v395, %v387
    %s405 = scalar_lea.vmem %s1, 2
    %v406 = vld [vmem:[%s405] ss:$8 sm:$0x3]
    %v408 = vlaneseq
    %v409 = vshrl.u32 %v408, 7
    %v410 = vsub.s32 0, %v409
    %v411 = vrot.slane %v406, %v410
    %v412 = vlaneseq
    %v413 = vshrl.u32 %v412, 7
    %v414 = vsub.s32 1, %v413
    %v415 = vrot.slane %v406, %v414
    %v418 = vmul.f32 %v401, %v411
    %v419 = vmul.f32 %v397, %v415
    %v420 = vmul.f32 %v402, %v411
    %v421 = vmul.f32 %v398, %v415
    %v422 = vmul.f32 %v403, %v411
    %v423 = vmul.f32 %v399, %v415
    %v424 = vmul.f32 %v404, %v411
    %v425 = vmul.f32 %v400, %v415
    %426 = vset.pattern.permute.xlu0 2
    %427 = vperm.xlu0 %426, %v33
    %v428 = vpop.permute.xlu0 %427
    %430 = vset.pattern.permute.xlu0 2
    %431 = vperm.xlu0 %430, %v34
    %v432 = vpop.permute.xlu0 %431
    %434 = vset.pattern.permute.xlu0 2
    %435 = vperm.xlu0 %434, %v35
    %v436 = vpop.permute.xlu0 %435
    %438 = vset.pattern.permute.xlu0 2
    %439 = vperm.xlu0 %438, %v36
    %v440 = vpop.permute.xlu0 %439
    %v442 = vmul.f32 %v428, %v418
    %v443 = vmul.f32 %v428, %v419
    %v444 = vmul.f32 %v432, %v420
    %v445 = vmul.f32 %v432, %v421
    %v446 = vmul.f32 %v436, %v422
    %v447 = vmul.f32 %v436, %v423
    %v448 = vmul.f32 %v440, %v424
    %v449 = vmul.f32 %v440, %v425
    %v450 = vadd.f32 %v372, %v442
    %v451 = vadd.f32 %v373, %v443
    %v452 = vadd.f32 %v374, %v444
    %v453 = vadd.f32 %v375, %v445
    %v454 = vadd.f32 %v376, %v446
    %v455 = vadd.f32 %v377, %v447
    %v456 = vadd.f32 %v378, %v448
    %v457 = vadd.f32 %v379, %v449
    %458 = vrot.lane.b32.xlu0 %v191, 1
    %v459 = vpop.permute.xlu0 %458
    %460 = vrot.lane.b32.xlu0 %v193, 1
    %v461 = vpop.permute.xlu0 %460
    %462 = vrot.lane.b32.xlu0 %v195, 1
    %v463 = vpop.permute.xlu0 %462
    %464 = vrot.lane.b32.xlu0 %v197, 1
    %v465 = vpop.permute.xlu0 %464
    %466 = vrot.lane.b32.xlu0 %v192, 1
    %v467 = vpop.permute.xlu0 %466
    %468 = vrot.lane.b32.xlu0 %v194, 1
    %v469 = vpop.permute.xlu0 %468
    %470 = vrot.lane.b32.xlu0 %v196, 1
    %v471 = vpop.permute.xlu0 %470
    %472 = vrot.lane.b32.xlu0 %v198, 1
    %v473 = vpop.permute.xlu0 %472
    %vm474 = vcmp.lt.s32.totalorder %v240, 1
    %v475 = vsel %vm474, %v459, %v467
    %v476 = vsel %vm474, %v461, %v469
    %v477 = vsel %vm474, %v463, %v471
    %v478 = vsel %vm474, %v465, %v473
    %v479 = vsel %vm474, %v467, %v459
    %v480 = vsel %vm474, %v469, %v461
    %v481 = vsel %vm474, %v471, %v463
    %v482 = vsel %vm474, %v473, %v465
    %s483 = scalar_lea.vmem %s1, 3
    %v484 = vld [vmem:[%s483] ss:$8 sm:$0x3]
    %v486 = vlaneseq
    %v487 = vshrl.u32 %v486, 7
    %v488 = vsub.s32 0, %v487
    %v489 = vrot.slane %v484, %v488
    %v490 = vlaneseq
    %v491 = vshrl.u32 %v490, 7
    %v492 = vsub.s32 1, %v491
    %v493 = vrot.slane %v484, %v492
    %v496 = vmul.f32 %v479, %v489
    %v497 = vmul.f32 %v475, %v493
    %v498 = vmul.f32 %v480, %v489
    %v499 = vmul.f32 %v476, %v493
    %v500 = vmul.f32 %v481, %v489
    %v501 = vmul.f32 %v477, %v493
    %v502 = vmul.f32 %v482, %v489
    %v503 = vmul.f32 %v478, %v493
    %504 = vset.pattern.permute.xlu0 3
    %505 = vperm.xlu0 %504, %v33
    %v506 = vpop.permute.xlu0 %505
    %508 = vset.pattern.permute.xlu0 3
    %509 = vperm.xlu0 %508, %v34
    %v510 = vpop.permute.xlu0 %509
    %512 = vset.pattern.permute.xlu0 3
    %513 = vperm.xlu0 %512, %v35
    %v514 = vpop.permute.xlu0 %513
    %516 = vset.pattern.permute.xlu0 3
    %517 = vperm.xlu0 %516, %v36
    %v518 = vpop.permute.xlu0 %517
    %v520 = vmul.f32 %v506, %v496
    %v521 = vmul.f32 %v506, %v497
    %v522 = vmul.f32 %v510, %v498
    %v523 = vmul.f32 %v510, %v499
    %v524 = vmul.f32 %v514, %v500
    %v525 = vmul.f32 %v514, %v501
    %v526 = vmul.f32 %v518, %v502
    %v527 = vmul.f32 %v518, %v503
    %v528 = vadd.f32 %v450, %v520
    %v529 = vadd.f32 %v451, %v521
    %v530 = vadd.f32 %v452, %v522
    %v531 = vadd.f32 %v453, %v523
    %v532 = vadd.f32 %v454, %v524
    %v533 = vadd.f32 %v455, %v525
    %v534 = vadd.f32 %v456, %v526
    %v535 = vadd.f32 %v457, %v527
    %536 = vrot.lane.b32.xlu0 %v191, 127
    %v537 = vpop.permute.xlu0 %536
    %538 = vrot.lane.b32.xlu0 %v193, 127
    %v539 = vpop.permute.xlu0 %538
    %540 = vrot.lane.b32.xlu0 %v195, 127
    %v541 = vpop.permute.xlu0 %540
    %542 = vrot.lane.b32.xlu0 %v197, 127
    %v543 = vpop.permute.xlu0 %542
    %544 = vrot.lane.b32.xlu0 %v192, 127
    %v545 = vpop.permute.xlu0 %544
    %546 = vrot.lane.b32.xlu0 %v194, 127
    %v547 = vpop.permute.xlu0 %546
    %548 = vrot.lane.b32.xlu0 %v196, 127
    %v549 = vpop.permute.xlu0 %548
    %550 = vrot.lane.b32.xlu0 %v198, 127
    %v551 = vpop.permute.xlu0 %550
    %vm552 = vcmp.lt.s32.totalorder %v240, 127
    %v553 = vsel %vm552, %v537, %v545
    %v554 = vsel %vm552, %v539, %v547
    %v555 = vsel %vm552, %v541, %v549
    %v556 = vsel %vm552, %v543, %v551
    %v557 = vsel %vm552, %v545, %v537
    %v558 = vsel %vm552, %v547, %v539
    %v559 = vsel %vm552, %v549, %v541
    %v560 = vsel %vm552, %v551, %v543
    %s561 = scalar_lea.vmem %s1, 5
    %v562 = vld [vmem:[%s561] ss:$8 sm:$0x3]
    %v564 = vlaneseq
    %v565 = vshrl.u32 %v564, 7
    %v566 = vsub.s32 0, %v565
    %v567 = vrot.slane %v562, %v566
    %v568 = vlaneseq
    %v569 = vshrl.u32 %v568, 7
    %v570 = vsub.s32 1, %v569
    %v571 = vrot.slane %v562, %v570
    %v574 = vmul.f32 %v553, %v567
    %v575 = vmul.f32 %v557, %v571
    %v576 = vmul.f32 %v554, %v567
    %v577 = vmul.f32 %v558, %v571
    %v578 = vmul.f32 %v555, %v567
    %v579 = vmul.f32 %v559, %v571
    %v580 = vmul.f32 %v556, %v567
    %v581 = vmul.f32 %v560, %v571
    %582 = vset.pattern.permute.xlu0 5
    %583 = vperm.xlu0 %582, %v33
    %v584 = vpop.permute.xlu0 %583
    %586 = vset.pattern.permute.xlu0 5
    %587 = vperm.xlu0 %586, %v34
    %v588 = vpop.permute.xlu0 %587
    %590 = vset.pattern.permute.xlu0 5
    %591 = vperm.xlu0 %590, %v35
    %v592 = vpop.permute.xlu0 %591
    %594 = vset.pattern.permute.xlu0 5
    %595 = vperm.xlu0 %594, %v36
    %v596 = vpop.permute.xlu0 %595
    %v598 = vmul.f32 %v584, %v574
    %v599 = vmul.f32 %v584, %v575
    %v600 = vmul.f32 %v588, %v576
    %v601 = vmul.f32 %v588, %v577
    %v602 = vmul.f32 %v592, %v578
    %v603 = vmul.f32 %v592, %v579
    %v604 = vmul.f32 %v596, %v580
    %v605 = vmul.f32 %v596, %v581
    %v606 = vadd.f32 %v528, %v598
    %v607 = vadd.f32 %v529, %v599
    %v608 = vadd.f32 %v530, %v600
    %v609 = vadd.f32 %v531, %v601
    %v610 = vadd.f32 %v532, %v602
    %v611 = vadd.f32 %v533, %v603
    %v612 = vadd.f32 %v534, %v604
    %v613 = vadd.f32 %v535, %v605
    %614 = vrot.lane.b32.xlu0 %v191, 113
    %v615 = vpop.permute.xlu0 %614
    %616 = vrot.lane.b32.xlu0 %v193, 113
    %v617 = vpop.permute.xlu0 %616
    %618 = vrot.lane.b32.xlu0 %v195, 113
    %v619 = vpop.permute.xlu0 %618
    %620 = vrot.lane.b32.xlu0 %v197, 113
    %v621 = vpop.permute.xlu0 %620
    %622 = vrot.lane.b32.xlu0 %v192, 113
    %v623 = vpop.permute.xlu0 %622
    %624 = vrot.lane.b32.xlu0 %v194, 113
    %v625 = vpop.permute.xlu0 %624
    %626 = vrot.lane.b32.xlu0 %v196, 113
    %v627 = vpop.permute.xlu0 %626
    %628 = vrot.lane.b32.xlu0 %v198, 113
    %v629 = vpop.permute.xlu0 %628
    %vm630 = vcmp.lt.s32.totalorder %v240, 113
    %v631 = vsel %vm630, %v615, %v623
    %v632 = vsel %vm630, %v617, %v625
    %v633 = vsel %vm630, %v619, %v627
    %v634 = vsel %vm630, %v621, %v629
    %v635 = vsel %vm630, %v623, %v615
    %v636 = vsel %vm630, %v625, %v617
    %v637 = vsel %vm630, %v627, %v619
    %v638 = vsel %vm630, %v629, %v621
    %s639 = scalar_lea.vmem %s1, 6
    %v640 = vld [vmem:[%s639] ss:$8 sm:$0x3]
    %v642 = vlaneseq
    %v643 = vshrl.u32 %v642, 7
    %v644 = vsub.s32 0, %v643
    %v645 = vrot.slane %v640, %v644
    %v646 = vlaneseq
    %v647 = vshrl.u32 %v646, 7
    %v648 = vsub.s32 1, %v647
    %v649 = vrot.slane %v640, %v648
    %v652 = vmul.f32 %v631, %v645
    %v653 = vmul.f32 %v635, %v649
    %v654 = vmul.f32 %v632, %v645
    %v655 = vmul.f32 %v636, %v649
    %v656 = vmul.f32 %v633, %v645
    %v657 = vmul.f32 %v637, %v649
    %v658 = vmul.f32 %v634, %v645
    %v659 = vmul.f32 %v638, %v649
    %660 = vset.pattern.permute.xlu0 6
    %661 = vperm.xlu0 %660, %v33
    %v662 = vpop.permute.xlu0 %661
    %664 = vset.pattern.permute.xlu0 6
    %665 = vperm.xlu0 %664, %v34
    %v666 = vpop.permute.xlu0 %665
    %668 = vset.pattern.permute.xlu0 6
    %669 = vperm.xlu0 %668, %v35
    %v670 = vpop.permute.xlu0 %669
    %672 = vset.pattern.permute.xlu0 6
    %673 = vperm.xlu0 %672, %v36
    %v674 = vpop.permute.xlu0 %673
    %v676 = vmul.f32 %v662, %v652
    %v677 = vmul.f32 %v662, %v653
    %v678 = vmul.f32 %v666, %v654
    %v679 = vmul.f32 %v666, %v655
    %v680 = vmul.f32 %v670, %v656
    %v681 = vmul.f32 %v670, %v657
    %v682 = vmul.f32 %v674, %v658
    %v683 = vmul.f32 %v674, %v659
    %v684 = vadd.f32 %v606, %v676
    %v685 = vadd.f32 %v607, %v677
    %v686 = vadd.f32 %v608, %v678
    %v687 = vadd.f32 %v609, %v679
    %v688 = vadd.f32 %v610, %v680
    %v689 = vadd.f32 %v611, %v681
    %v690 = vadd.f32 %v612, %v682
    %v691 = vadd.f32 %v613, %v683
    %692 = vrot.lane.b32.xlu0 %v191, 112
    %v693 = vpop.permute.xlu0 %692
    %694 = vrot.lane.b32.xlu0 %v193, 112
    %v695 = vpop.permute.xlu0 %694
    %696 = vrot.lane.b32.xlu0 %v195, 112
    %v697 = vpop.permute.xlu0 %696
    %698 = vrot.lane.b32.xlu0 %v197, 112
    %v699 = vpop.permute.xlu0 %698
    %700 = vrot.lane.b32.xlu0 %v192, 112
    %v701 = vpop.permute.xlu0 %700
    %702 = vrot.lane.b32.xlu0 %v194, 112
    %v703 = vpop.permute.xlu0 %702
    %704 = vrot.lane.b32.xlu0 %v196, 112
    %v705 = vpop.permute.xlu0 %704
    %706 = vrot.lane.b32.xlu0 %v198, 112
    %v707 = vpop.permute.xlu0 %706
    %vm708 = vcmp.lt.s32.totalorder %v240, 112
    %v709 = vsel %vm708, %v693, %v701
    %v710 = vsel %vm708, %v695, %v703
    %v711 = vsel %vm708, %v697, %v705
    %v712 = vsel %vm708, %v699, %v707
    %v713 = vsel %vm708, %v701, %v693
    %v714 = vsel %vm708, %v703, %v695
    %v715 = vsel %vm708, %v705, %v697
    %v716 = vsel %vm708, %v707, %v699
    %s717 = scalar_lea.vmem %s1, 7
    %v718 = vld [vmem:[%s717] ss:$8 sm:$0x3]
    %v720 = vlaneseq
    %v721 = vshrl.u32 %v720, 7
    %v722 = vsub.s32 0, %v721
    %v723 = vrot.slane %v718, %v722
    %v724 = vlaneseq
    %v725 = vshrl.u32 %v724, 7
    %v726 = vsub.s32 1, %v725
    %v727 = vrot.slane %v718, %v726
    %v730 = vmul.f32 %v709, %v723
    %v731 = vmul.f32 %v713, %v727
    %v732 = vmul.f32 %v710, %v723
    %v733 = vmul.f32 %v714, %v727
    %v734 = vmul.f32 %v711, %v723
    %v735 = vmul.f32 %v715, %v727
    %v736 = vmul.f32 %v712, %v723
    %v737 = vmul.f32 %v716, %v727
    %738 = vset.pattern.permute.xlu0 7
    %739 = vperm.xlu0 %738, %v33
    %v740 = vpop.permute.xlu0 %739
    %742 = vset.pattern.permute.xlu0 7
    %743 = vperm.xlu0 %742, %v34
    %v744 = vpop.permute.xlu0 %743
    %746 = vset.pattern.permute.xlu0 7
    %747 = vperm.xlu0 %746, %v35
    %v748 = vpop.permute.xlu0 %747
    %750 = vset.pattern.permute.xlu0 7
    %751 = vperm.xlu0 %750, %v36
    %v752 = vpop.permute.xlu0 %751
    %v754 = vmul.f32 %v740, %v730
    %v755 = vmul.f32 %v740, %v731
    %v756 = vmul.f32 %v744, %v732
    %v757 = vmul.f32 %v744, %v733
    %v758 = vmul.f32 %v748, %v734
    %v759 = vmul.f32 %v748, %v735
    %v760 = vmul.f32 %v752, %v736
    %v761 = vmul.f32 %v752, %v737
    %v762 = vadd.f32 %v684, %v754
    %v763 = vadd.f32 %v685, %v755
    %v764 = vadd.f32 %v686, %v756
    %v765 = vadd.f32 %v687, %v757
    %v766 = vadd.f32 %v688, %v758
    %v767 = vadd.f32 %v689, %v759
    %v768 = vadd.f32 %v690, %v760
    %v769 = vadd.f32 %v691, %v761
    %770 = vrot.lane.b32.xlu0 %v191, 111
    %v771 = vpop.permute.xlu0 %770
    %772 = vrot.lane.b32.xlu0 %v193, 111
    %v773 = vpop.permute.xlu0 %772
    %774 = vrot.lane.b32.xlu0 %v195, 111
    %v775 = vpop.permute.xlu0 %774
    %776 = vrot.lane.b32.xlu0 %v197, 111
    %v777 = vpop.permute.xlu0 %776
    %778 = vrot.lane.b32.xlu0 %v192, 111
    %v779 = vpop.permute.xlu0 %778
    %780 = vrot.lane.b32.xlu0 %v194, 111
    %v781 = vpop.permute.xlu0 %780
    %782 = vrot.lane.b32.xlu0 %v196, 111
    %v783 = vpop.permute.xlu0 %782
    %784 = vrot.lane.b32.xlu0 %v198, 111
    %v785 = vpop.permute.xlu0 %784
    %vm786 = vcmp.lt.s32.totalorder %v240, 111
    %v787 = vsel %vm786, %v771, %v779
    %v788 = vsel %vm786, %v773, %v781
    %v789 = vsel %vm786, %v775, %v783
    %v790 = vsel %vm786, %v777, %v785
    %v791 = vsel %vm786, %v779, %v771
    %v792 = vsel %vm786, %v781, %v773
    %v793 = vsel %vm786, %v783, %v775
    %v794 = vsel %vm786, %v785, %v777
    %s795 = scalar_lea.vmem %s1, 16
    %v796 = vld [vmem:[%s795] ss:$8 sm:$0x3]
    %v798 = vlaneseq
    %v799 = vshrl.u32 %v798, 7
    %v800 = vsub.s32 0, %v799
    %v801 = vrot.slane %v796, %v800
    %v802 = vlaneseq
    %v803 = vshrl.u32 %v802, 7
    %v804 = vsub.s32 1, %v803
    %v805 = vrot.slane %v796, %v804
    %v808 = vmul.f32 %v787, %v801
    %v809 = vmul.f32 %v791, %v805
    %v810 = vmul.f32 %v788, %v801
    %v811 = vmul.f32 %v792, %v805
    %v812 = vmul.f32 %v789, %v801
    %v813 = vmul.f32 %v793, %v805
    %v814 = vmul.f32 %v790, %v801
    %v815 = vmul.f32 %v794, %v805
    %816 = vset.pattern.permute.xlu0 8
    %817 = vperm.xlu0 %816, %v33
    %v818 = vpop.permute.xlu0 %817
    %820 = vset.pattern.permute.xlu0 8
    %821 = vperm.xlu0 %820, %v34
    %v822 = vpop.permute.xlu0 %821
    %824 = vset.pattern.permute.xlu0 8
    %825 = vperm.xlu0 %824, %v35
    %v826 = vpop.permute.xlu0 %825
    %828 = vset.pattern.permute.xlu0 8
    %829 = vperm.xlu0 %828, %v36
    %v830 = vpop.permute.xlu0 %829
    %v832 = vmul.f32 %v818, %v808
    %v833 = vmul.f32 %v818, %v809
    %v834 = vmul.f32 %v822, %v810
    %v835 = vmul.f32 %v822, %v811
    %v836 = vmul.f32 %v826, %v812
    %v837 = vmul.f32 %v826, %v813
    %v838 = vmul.f32 %v830, %v814
    %v839 = vmul.f32 %v830, %v815
    %v840 = vadd.f32 %v762, %v832
    %v841 = vadd.f32 %v763, %v833
    %v842 = vadd.f32 %v764, %v834
    %v843 = vadd.f32 %v765, %v835
    %v844 = vadd.f32 %v766, %v836
    %v845 = vadd.f32 %v767, %v837
    %v846 = vadd.f32 %v768, %v838
    %v847 = vadd.f32 %v769, %v839
    %848 = vset.pattern.permute.xlu0 10
    %849 = vperm.xlu0 %848, %v33
    %v850 = vpop.permute.xlu0 %849
    %852 = vset.pattern.permute.xlu0 10
    %853 = vperm.xlu0 %852, %v34
    %v854 = vpop.permute.xlu0 %853
    %856 = vset.pattern.permute.xlu0 10
    %857 = vperm.xlu0 %856, %v35
    %v858 = vpop.permute.xlu0 %857
    %860 = vset.pattern.permute.xlu0 10
    %861 = vperm.xlu0 %860, %v36
    %v862 = vpop.permute.xlu0 %861
    %v864 = vadd.f32 %v840, %v850
    %v865 = vadd.f32 %v841, %v850
    %v866 = vadd.f32 %v842, %v854
    %v867 = vadd.f32 %v843, %v854
    %v868 = vadd.f32 %v844, %v858
    %v869 = vadd.f32 %v845, %v858
    %v870 = vadd.f32 %v846, %v862
    %v871 = vadd.f32 %v847, %v862
    %v872 = vmul.f32 %v864, 0.5
    %v873 = vmul.f32 %v865, 0.5
    %v874 = vmul.f32 %v866, 0.5
    %v875 = vmul.f32 %v867, 0.5
    %v876 = vmul.f32 %v868, 0.5
    %v877 = vmul.f32 %v869, 0.5
    %v878 = vmul.f32 %v870, 0.5
    %v879 = vmul.f32 %v871, 0.5
    %v880 = vtanh.pop %v872
    %v881 = vtanh.pop %v873
    %v882 = vtanh.pop %v874
    %v883 = vtanh.pop %v875
    %v884 = vtanh.pop %v876
    %v885 = vtanh.pop %v877
    %v886 = vtanh.pop %v878
    %v887 = vtanh.pop %v879
    %v888 = vmul.f32 %v880, 0.5
    %v889 = vmul.f32 %v881, 0.5
    %v890 = vmul.f32 %v882, 0.5
    %v891 = vmul.f32 %v883, 0.5
    %v892 = vmul.f32 %v884, 0.5
    %v893 = vmul.f32 %v885, 0.5
    %v894 = vmul.f32 %v886, 0.5
    %v895 = vmul.f32 %v887, 0.5
    %v896 = vadd.f32 %v888, 0.5
    %v897 = vadd.f32 %v889, 0.5
    %v898 = vadd.f32 %v890, 0.5
    %v899 = vadd.f32 %v891, 0.5
    %v900 = vadd.f32 %v892, 0.5
    %v901 = vadd.f32 %v893, 0.5
    %v902 = vadd.f32 %v894, 0.5
    %v903 = vadd.f32 %v895, 0.5
    %v904 = vmul.f32 %v864, %v896
    %v905 = vmul.f32 %v865, %v897
    %v906 = vmul.f32 %v866, %v898
    %v907 = vmul.f32 %v867, %v899
    %v908 = vmul.f32 %v868, %v900
    %v909 = vmul.f32 %v869, %v901
    %v910 = vmul.f32 %v870, %v902
    %v911 = vmul.f32 %v871, %v903
    %v912 = vadd.f32 %v904, %v905
    %913 = vadd.xlane.f32.xlu0 %v912
    %v914 = vpop.xlane.xlu0 %913
    %v915 = vadd.f32 %v906, %v907
    %916 = vadd.xlane.f32.xlu0 %v915
    %v917 = vpop.xlane.xlu0 %916
    %v918 = vadd.f32 %v908, %v909
    %919 = vadd.xlane.f32.xlu0 %v918
    %v920 = vpop.xlane.xlu0 %919
    %v921 = vadd.f32 %v910, %v911
    %922 = vadd.xlane.f32.xlu0 %v921
    %v923 = vpop.xlane.xlu0 %922
    %v924 = vmul.f32 %v914, 0.00390625
    %v925 = vmul.f32 %v917, 0.00390625
    %v926 = vmul.f32 %v920, 0.00390625
    %v927 = vmul.f32 %v923, 0.00390625
    %v928 = vmul.f32 %v33, %v924
    %v929 = vmul.f32 %v34, %v925
    %v930 = vmul.f32 %v35, %v926
    %v931 = vmul.f32 %v36, %v927
    %vm932 = vcmask 105560
    %v933 = vsel %vm932, %v928, 0.0
    %v934 = vsel %vm932, %v929, 0.0
    %v935 = vadd.f32 %v933, %v934
    %v936 = vsel %vm932, %v930, 0.0
    %v937 = vadd.f32 %v935, %v936
    %v938 = vsel %vm932, %v931, 0.0
    %v939 = vadd.f32 %v937, %v938
    %v940 = vrot.slane %v939, 4
    %v941 = vadd.f32 %v939, %v940
    %v942 = vrot.slane %v941, 2
    %v943 = vadd.f32 %v941, %v942
    %v944 = vrot.slane %v943, 1
    %v945 = vadd.f32 %v943, %v944
    %v946 = vld [vmem:[%s4] sm:$0x1]
    %v948 = vlaneseq
    %v949 = vshrl.u32 %v948, 7
    %v950 = vsub.s32 0, %v949
    %v951 = vrot.slane %v946, %v950
    %952 = vrot.lane.b32.xlu0 %v951, 11
    %v953 = vpop.permute.xlu0 %952
    %v955 = vadd.f32 %v945, %v953
    %v956 = vmul.f32 %v955, 0.5
    %v957 = vtanh.pop %v956
    %v958 = vmul.f32 %v957, 0.5
    %v959 = vadd.f32 %v958, 0.5
    %v960 = vmul.f32 %v955, %v959
    %v961 = vlaneseq
    %v962 = vshrl.u32 %v961, 7
    %v963 = vsub.s32 0, %v962
    %v964 = vrot.slane %v960, %v963
    %966 = vrot.lane.b32.xlu0 %v964, 2
    %v967 = vpop.permute.xlu0 %966
    %v969 = vmul.f32 %v33, %v967
    %v970 = vmul.f32 %v34, %v967
    %v971 = vmul.f32 %v35, %v967
    %v972 = vmul.f32 %v36, %v967
    %977 = vrot.lane.b32.xlu0 %v969, 115
    %v978 = vpop.permute.xlu0 %977
    %979 = vrot.lane.b32.xlu0 %v970, 115
    %v980 = vpop.permute.xlu0 %979
    %981 = vrot.lane.b32.xlu0 %v971, 115
    %v982 = vpop.permute.xlu0 %981
    %983 = vrot.lane.b32.xlu0 %v972, 115
    %v984 = vpop.permute.xlu0 %983
    %vm989 = vcmask 15360
    %v990 = vsel %vm989, %v978, 0.0
    %991 = vadd.xlane.f32.xlu0 %v990
    %v992 = vpop.xlane.xlu0 %991
    %v993 = vsel %vm989, %v980, 0.0
    %994 = vadd.xlane.f32.xlu0 %v993
    %v995 = vpop.xlane.xlu0 %994
    %v996 = vsel %vm989, %v982, 0.0
    %997 = vadd.xlane.f32.xlu0 %v996
    %v998 = vpop.xlane.xlu0 %997
    %v999 = vsel %vm989, %v984, 0.0
    %1000 = vadd.xlane.f32.xlu0 %v999
    %v1001 = vpop.xlane.xlu0 %1000
    %v1002 = vadd.f32 %v992, %v33
    %v1003 = vadd.f32 %v995, %v34
    %v1004 = vadd.f32 %v998, %v35
    %v1005 = vadd.f32 %v1001, %v36
    %v1006 = vmul.f32 %v1002, 0.5
    %v1007 = vmul.f32 %v1003, 0.5
    %v1008 = vmul.f32 %v1004, 0.5
    %v1009 = vmul.f32 %v1005, 0.5
    %v1010 = vtanh.pop %v1006
    %v1011 = vtanh.pop %v1007
    %v1012 = vtanh.pop %v1008
    %v1013 = vtanh.pop %v1009
    %v1014 = vmul.f32 %v1010, 0.5
    %v1015 = vmul.f32 %v1011, 0.5
    %v1016 = vmul.f32 %v1012, 0.5
    %v1017 = vmul.f32 %v1013, 0.5
    %v1018 = vadd.f32 %v1014, 0.5
    %v1019 = vadd.f32 %v1015, 0.5
    %v1020 = vadd.f32 %v1016, 0.5
    %v1021 = vadd.f32 %v1017, 0.5
    %1023 = vset.pattern.permute.xlu0 15
    %1024 = vperm.xlu0 %1023, %v1018
    %v1025 = vpop.permute.xlu0 %1024
    %1028 = vset.pattern.permute.xlu0 15
    %1029 = vperm.xlu0 %1028, %v1019
    %v1030 = vpop.permute.xlu0 %1029
    %1033 = vset.pattern.permute.xlu0 15
    %1034 = vperm.xlu0 %1033, %v1020
    %v1035 = vpop.permute.xlu0 %1034
    %1038 = vset.pattern.permute.xlu0 15
    %1039 = vperm.xlu0 %1038, %v1021
    %v1040 = vpop.permute.xlu0 %1039
    %v1042 = vmul.f32 %v904, %v1025
    %v1043 = vmul.f32 %v905, %v1025
    %v1044 = vmul.f32 %v906, %v1030
    %v1045 = vmul.f32 %v907, %v1030
    %v1046 = vmul.f32 %v908, %v1035
    %v1047 = vmul.f32 %v909, %v1035
    %v1048 = vmul.f32 %v910, %v1040
    %v1049 = vmul.f32 %v911, %v1040
    %v1050 = vld [vmem:[%s5] sm:$0xff]
    %v1051 = vld [vmem:[%s6] sm:$0xff]
    %1053 = vset.pattern.permute.xlu0 0
    %1054 = vperm.xlu0 %1053, %v1051
    %v1055 = vpop.permute.xlu0 %1054
    %vm1057 = vcmask 261120
    %v1059 = vsel %vm1057, %v1050, 0
    %1061 = vmatprep.subr.mxu0 %v1043
    %1062 = vmatpush1.msra.mxu0 %v1042
    %1063 = vmatprep.subr.mxu0 %v1045
    %1064 = vmatpush1.msra.mxu0 %v1044
    %1065 = vmatprep.subr.mxu0 %v1047
    %1066 = vmatpush1.msra.mxu0 %v1046
    %1067 = vmatprep.subr.mxu0 %v1049
    %1068 = vmatpush1.msra.mxu0 %v1048
    %1069 = vmatprep.subr.mxu0 0.0
    %1070 = vmatpush1.msra.mxu0 0.0
    %1071 = vmatprep.subr.mxu0 0.0
    %1072 = vmatpush1.msra.mxu0 0.0
    %1073 = vmatprep.subr.mxu0 0.0
    %1074 = vmatpush1.msra.mxu0 0.0
    %1075 = vmatprep.subr.mxu0 0.0
    %1076 = vmatpush1.msra.mxu0 0.0
    %1077 = vmatprep.subr.mxu0 0.0
    %1078 = vmatpush1.msra.mxu0 0.0
    %1079 = vmatprep.subr.mxu0 0.0
    %1080 = vmatpush1.msra.mxu0 0.0
    %1081 = vmatprep.subr.mxu0 0.0
    %1082 = vmatpush1.msra.mxu0 0.0
    %1083 = vmatprep.subr.mxu0 0.0
    %1084 = vmatpush1.msra.mxu0 0.0
    %1085 = vmatprep.subr.mxu0 0.0
    %1086 = vmatpush1.msra.mxu0 0.0
    %1087 = vmatprep.subr.mxu0 0.0
    %1088 = vmatpush1.msra.mxu0 0.0
    %1089 = vmatprep.subr.mxu0 0.0
    %1090 = vmatpush1.msra.mxu0 0.0
    %1091 = vmatprep.subr.mxu0 0.0
    %1092 = vmatpush1.msra.mxu0 0.0
    %1093 = vmatprep.subr.mxu0 0.0
    %1094 = vmatpush1.msra.mxu0 0.0
    %1095 = vmatprep.subr.mxu0 0.0
    %1096 = vmatpush1.msra.mxu0 0.0
    %1097 = vmatprep.subr.mxu0 0.0
    %1098 = vmatpush1.msra.mxu0 0.0
    %1099 = vmatprep.subr.mxu0 0.0
    %1100 = vmatpush1.msra.mxu0 0.0
    %1101 = vmatprep.subr.mxu0 0.0
    %1102 = vmatpush1.msra.mxu0 0.0
    %1103 = vmatprep.subr.mxu0 0.0
    %1104 = vmatpush1.msra.mxu0 0.0
    %1105 = vmatprep.subr.mxu0 0.0
    %1106 = vmatpush1.msra.mxu0 0.0
    %1107 = vmatprep.subr.mxu0 0.0
    %1108 = vmatpush1.msra.mxu0 0.0
    %1109 = vmatprep.subr.mxu0 0.0
    %1110 = vmatpush1.msra.mxu0 0.0
    %1111 = vmatprep.subr.mxu0 0.0
    %1112 = vmatpush1.msra.mxu0 0.0
    %1113 = vmatprep.subr.mxu0 0.0
    %1114 = vmatpush1.msra.mxu0 0.0
    %1115 = vmatprep.subr.mxu0 0.0
    %1116 = vmatpush1.msra.mxu0 0.0
    %1117 = vmatprep.subr.mxu0 0.0
    %1118 = vmatpush1.msra.mxu0 0.0
    %1119 = vmatprep.subr.mxu0 0.0
    %1120 = vmatpush1.msra.mxu0 0.0
    %1121 = vmatprep.subr.mxu0 0.0
    %1122 = vmatpush1.msra.mxu0 0.0
    %1123 = vmatprep.subr.mxu0 0.0
    %1124 = vmatpush1.msra.mxu0 0.0
    %1125 = vmatprep.mubr.f32.mxu0 0.0
    %1126 = vmatmul.mubr.f32.gmra.mrb[0].mxu0 %v1059
    %v1127 = vpop.f32.mrb[0].mxu0
    %v1128 = vadd.f32 %v1055, %v1127
    %v1129 = vpop.f32.mrb[0].mxu0
    %v1130 = vadd.f32 %v1055, %v1129
    %1131 = vdwg.mxu0
    %v1132 = vadd.f32 %v1128, %v27
    %v1133 = vadd.f32 %v1130, %v28
    %1134 = vst [vmem:[#allocation2] sm:$0xff] %v1132
    %1135 = vst [vmem:[#allocation2 + $0x8] sm:$0xff] %v1133
    %v1136 = vld [vmem:[%s0 + $0x10] sm:$0xff]
    %v1137 = vld [vmem:[%s0 + $0x18] sm:$0xff]
    %v1138 = vld [vmem:[%s2] sm:$0xff]
    %v1139 = vld [vmem:[%s2 + $0x8] sm:$0xff]
    %v1140 = vld [vmem:[%s2 + $0x10] sm:$0xff]
    %v1141 = vld [vmem:[%s2 + $0x18] sm:$0xff]
    %v1142 = vld [vmem:[%s3] sm:$0xff]
    %v1143 = vld [vmem:[%s3 + $0x8] sm:$0xff]
    %v1144 = vld [vmem:[%s3 + $0x10] sm:$0xff]
    %v1145 = vld [vmem:[%s3 + $0x18] sm:$0xff]
    %1147 = vset.pattern.permute.xlu0 9
    %1148 = vperm.xlu0 %1147, %v1142
    %v1149 = vpop.permute.xlu0 %1148
    %1152 = vset.pattern.permute.xlu0 9
    %1153 = vperm.xlu0 %1152, %v1143
    %v1154 = vpop.permute.xlu0 %1153
    %1157 = vset.pattern.permute.xlu0 9
    %1158 = vperm.xlu0 %1157, %v1144
    %v1159 = vpop.permute.xlu0 %1158
    %1162 = vset.pattern.permute.xlu0 9
    %1163 = vperm.xlu0 %1162, %v1145
    %v1164 = vpop.permute.xlu0 %1163
    %v1167 = vsel %vm57, %v1138, 0
    %v1170 = vsel %vm57, %v1139, 0
    %v1173 = vsel %vm57, %v1140, 0
    %v1176 = vsel %vm57, %v1141, 0
    %1178 = vmatprep.subr.mxu0 %v1137
    %1179 = vmatpush1.msra.mxu0 %v1136
    %1180 = vmatprep.subr.mxu0 0.0
    %1181 = vmatpush1.msra.mxu0 0.0
    %1182 = vmatprep.subr.mxu0 0.0
    %1183 = vmatpush1.msra.mxu0 0.0
    %1184 = vmatprep.subr.mxu0 0.0
    %1185 = vmatpush1.msra.mxu0 0.0
    %1186 = vmatprep.subr.mxu0 0.0
    %1187 = vmatpush1.msra.mxu0 0.0
    %1188 = vmatprep.subr.mxu0 0.0
    %1189 = vmatpush1.msra.mxu0 0.0
    %1190 = vmatprep.subr.mxu0 0.0
    %1191 = vmatpush1.msra.mxu0 0.0
    %1192 = vmatprep.subr.mxu0 0.0
    %1193 = vmatpush1.msra.mxu0 0.0
    %1194 = vmatprep.subr.mxu0 0.0
    %1195 = vmatpush1.msra.mxu0 0.0
    %1196 = vmatprep.subr.mxu0 0.0
    %1197 = vmatpush1.msra.mxu0 0.0
    %1198 = vmatprep.subr.mxu0 0.0
    %1199 = vmatpush1.msra.mxu0 0.0
    %1200 = vmatprep.subr.mxu0 0.0
    %1201 = vmatpush1.msra.mxu0 0.0
    %1202 = vmatprep.subr.mxu0 0.0
    %1203 = vmatpush1.msra.mxu0 0.0
    %1204 = vmatprep.subr.mxu0 0.0
    %1205 = vmatpush1.msra.mxu0 0.0
    %1206 = vmatprep.subr.mxu0 0.0
    %1207 = vmatpush1.msra.mxu0 0.0
    %1208 = vmatprep.subr.mxu0 0.0
    %1209 = vmatpush1.msra.mxu0 0.0
    %1210 = vmatprep.subr.mxu0 0.0
    %1211 = vmatpush1.msra.mxu0 0.0
    %1212 = vmatprep.subr.mxu0 0.0
    %1213 = vmatpush1.msra.mxu0 0.0
    %1214 = vmatprep.subr.mxu0 0.0
    %1215 = vmatpush1.msra.mxu0 0.0
    %1216 = vmatprep.subr.mxu0 0.0
    %1217 = vmatpush1.msra.mxu0 0.0
    %1218 = vmatprep.subr.mxu0 0.0
    %1219 = vmatpush1.msra.mxu0 0.0
    %1220 = vmatprep.subr.mxu0 0.0
    %1221 = vmatpush1.msra.mxu0 0.0
    %1222 = vmatprep.subr.mxu0 0.0
    %1223 = vmatpush1.msra.mxu0 0.0
    %1224 = vmatprep.subr.mxu0 0.0
    %1225 = vmatpush1.msra.mxu0 0.0
    %1226 = vmatprep.subr.mxu0 0.0
    %1227 = vmatpush1.msra.mxu0 0.0
    %1228 = vmatprep.subr.mxu0 0.0
    %1229 = vmatpush1.msra.mxu0 0.0
    %1230 = vmatprep.subr.mxu0 0.0
    %1231 = vmatpush1.msra.mxu0 0.0
    %1232 = vmatprep.subr.mxu0 0.0
    %1233 = vmatpush1.msra.mxu0 0.0
    %1234 = vmatprep.subr.mxu0 0.0
    %1235 = vmatpush1.msra.mxu0 0.0
    %1236 = vmatprep.subr.mxu0 0.0
    %1237 = vmatpush1.msra.mxu0 0.0
    %1238 = vmatprep.subr.mxu0 0.0
    %1239 = vmatpush1.msra.mxu0 0.0
    %1240 = vmatprep.subr.mxu0 0.0
    %1241 = vmatpush1.msra.mxu0 0.0
    %1242 = vmatprep.mubr.f32.mxu0 0.0
    %1243 = vmatmul.mubr.f32.gmra.mrb[0].mxu0 %v1167
    %v1244 = vpop.f32.mrb[0].mxu0
    %v1245 = vadd.f32 %v1149, %v1244
    %v1246 = vpop.f32.mrb[0].mxu0
    %v1247 = vadd.f32 %v1149, %v1246
    %1248 = vmatprep.mubr.f32.mxu0 0.0
    %1249 = vmatmul.mubr.f32.gmra.mrb[0].mxu0 %v1170
    %v1250 = vpop.f32.mrb[0].mxu0
    %v1251 = vadd.f32 %v1154, %v1250
    %v1252 = vpop.f32.mrb[0].mxu0
    %v1253 = vadd.f32 %v1154, %v1252
    %1254 = vmatprep.mubr.f32.mxu0 0.0
    %1255 = vmatmul.mubr.f32.gmra.mrb[0].mxu0 %v1173
    %v1256 = vpop.f32.mrb[0].mxu0
    %v1257 = vadd.f32 %v1159, %v1256
    %v1258 = vpop.f32.mrb[0].mxu0
    %v1259 = vadd.f32 %v1159, %v1258
    %1260 = vmatprep.mubr.f32.mxu0 0.0
    %1261 = vmatmul.mubr.f32.gmra.mrb[0].mxu0 %v1176
    %v1262 = vpop.f32.mrb[0].mxu0
    %v1263 = vadd.f32 %v1164, %v1262
    %v1264 = vpop.f32.mrb[0].mxu0
    %v1265 = vadd.f32 %v1164, %v1264
    %1266 = vdwg.mxu0
    %v1267 = vmul.f32 %v1245, 0.5
    %v1268 = vmul.f32 %v1247, 0.5
    %v1269 = vmul.f32 %v1251, 0.5
    %v1270 = vmul.f32 %v1253, 0.5
    %v1271 = vmul.f32 %v1257, 0.5
    %v1272 = vmul.f32 %v1259, 0.5
    %v1273 = vmul.f32 %v1263, 0.5
    %v1274 = vmul.f32 %v1265, 0.5
    %v1275 = vtanh.pop %v1267
    %v1276 = vtanh.pop %v1268
    %v1277 = vtanh.pop %v1269
    %v1278 = vtanh.pop %v1270
    %v1279 = vtanh.pop %v1271
    %v1280 = vtanh.pop %v1272
    %v1281 = vtanh.pop %v1273
    %v1282 = vtanh.pop %v1274
    %v1283 = vmul.f32 %v1275, 0.5
    %v1284 = vmul.f32 %v1276, 0.5
    %v1285 = vmul.f32 %v1277, 0.5
    %v1286 = vmul.f32 %v1278, 0.5
    %v1287 = vmul.f32 %v1279, 0.5
    %v1288 = vmul.f32 %v1280, 0.5
    %v1289 = vmul.f32 %v1281, 0.5
    %v1290 = vmul.f32 %v1282, 0.5
    %v1291 = vadd.f32 %v1283, 0.5
    %v1292 = vadd.f32 %v1284, 0.5
    %v1293 = vadd.f32 %v1285, 0.5
    %v1294 = vadd.f32 %v1286, 0.5
    %v1295 = vadd.f32 %v1287, 0.5
    %v1296 = vadd.f32 %v1288, 0.5
    %v1297 = vadd.f32 %v1289, 0.5
    %v1298 = vadd.f32 %v1290, 0.5
    %v1299 = vmul.f32 %v1245, %v1291
    %v1300 = vmul.f32 %v1247, %v1292
    %v1301 = vmul.f32 %v1251, %v1293
    %v1302 = vmul.f32 %v1253, %v1294
    %v1303 = vmul.f32 %v1257, %v1295
    %v1304 = vmul.f32 %v1259, %v1296
    %v1305 = vmul.f32 %v1263, %v1297
    %v1306 = vmul.f32 %v1265, %v1298
    %1307 = vset.pattern.permute.xlu0 4
    %1308 = vperm.xlu0 %1307, %v1142
    %v1309 = vpop.permute.xlu0 %1308
    %1311 = vset.pattern.permute.xlu0 4
    %1312 = vperm.xlu0 %1311, %v1143
    %v1313 = vpop.permute.xlu0 %1312
    %1315 = vset.pattern.permute.xlu0 4
    %1316 = vperm.xlu0 %1315, %v1144
    %v1317 = vpop.permute.xlu0 %1316
    %1319 = vset.pattern.permute.xlu0 4
    %1320 = vperm.xlu0 %1319, %v1145
    %v1321 = vpop.permute.xlu0 %1320
    %v1323 = vmul.f32 %v1309, %v1299
    %v1324 = vmul.f32 %v1309, %v1300
    %v1325 = vmul.f32 %v1313, %v1301
    %v1326 = vmul.f32 %v1313, %v1302
    %v1327 = vmul.f32 %v1317, %v1303
    %v1328 = vmul.f32 %v1317, %v1304
    %v1329 = vmul.f32 %v1321, %v1305
    %v1330 = vmul.f32 %v1321, %v1306
    %1331 = vrot.lane.b32.xlu0 %v1299, 17
    %v1332 = vpop.permute.xlu0 %1331
    %1333 = vrot.lane.b32.xlu0 %v1301, 17
    %v1334 = vpop.permute.xlu0 %1333
    %1335 = vrot.lane.b32.xlu0 %v1303, 17
    %v1336 = vpop.permute.xlu0 %1335
    %1337 = vrot.lane.b32.xlu0 %v1305, 17
    %v1338 = vpop.permute.xlu0 %1337
    %1339 = vrot.lane.b32.xlu0 %v1300, 17
    %v1340 = vpop.permute.xlu0 %1339
    %1341 = vrot.lane.b32.xlu0 %v1302, 17
    %v1342 = vpop.permute.xlu0 %1341
    %1343 = vrot.lane.b32.xlu0 %v1304, 17
    %v1344 = vpop.permute.xlu0 %1343
    %1345 = vrot.lane.b32.xlu0 %v1306, 17
    %v1346 = vpop.permute.xlu0 %1345
    %v1347 = vsel %vm241, %v1332, %v1340
    %v1348 = vsel %vm241, %v1334, %v1342
    %v1349 = vsel %vm241, %v1336, %v1344
    %v1350 = vsel %vm241, %v1338, %v1346
    %v1351 = vsel %vm241, %v1340, %v1332
    %v1352 = vsel %vm241, %v1342, %v1334
    %v1353 = vsel %vm241, %v1344, %v1336
    %v1354 = vsel %vm241, %v1346, %v1338
    %v1355 = vld [vmem:[%s1] ss:$8 sm:$0x3]
    %v1357 = vlaneseq
    %v1358 = vshrl.u32 %v1357, 7
    %v1359 = vsub.s32 0, %v1358
    %v1360 = vrot.slane %v1355, %v1359
    %v1361 = vlaneseq
    %v1362 = vshrl.u32 %v1361, 7
    %v1363 = vsub.s32 1, %v1362
    %v1364 = vrot.slane %v1355, %v1363
    %v1367 = vmul.f32 %v1351, %v1360
    %v1368 = vmul.f32 %v1347, %v1364
    %v1369 = vmul.f32 %v1352, %v1360
    %v1370 = vmul.f32 %v1348, %v1364
    %v1371 = vmul.f32 %v1353, %v1360
    %v1372 = vmul.f32 %v1349, %v1364
    %v1373 = vmul.f32 %v1354, %v1360
    %v1374 = vmul.f32 %v1350, %v1364
    %1375 = vset.pattern.permute.xlu0 0
    %1376 = vperm.xlu0 %1375, %v1142
    %v1377 = vpop.permute.xlu0 %1376
    %1379 = vset.pattern.permute.xlu0 0
    %1380 = vperm.xlu0 %1379, %v1143
    %v1381 = vpop.permute.xlu0 %1380
    %1383 = vset.pattern.permute.xlu0 0
    %1384 = vperm.xlu0 %1383, %v1144
    %v1385 = vpop.permute.xlu0 %1384
    %1387 = vset.pattern.permute.xlu0 0
    %1388 = vperm.xlu0 %1387, %v1145
    %v1389 = vpop.permute.xlu0 %1388
    %v1391 = vmul.f32 %v1377, %v1367
    %v1392 = vmul.f32 %v1377, %v1368
    %v1393 = vmul.f32 %v1381, %v1369
    %v1394 = vmul.f32 %v1381, %v1370
    %v1395 = vmul.f32 %v1385, %v1371
    %v1396 = vmul.f32 %v1385, %v1372
    %v1397 = vmul.f32 %v1389, %v1373
    %v1398 = vmul.f32 %v1389, %v1374
    %v1399 = vadd.f32 %v1323, %v1391
    %v1400 = vadd.f32 %v1324, %v1392
    %v1401 = vadd.f32 %v1325, %v1393
    %v1402 = vadd.f32 %v1326, %v1394
    %v1403 = vadd.f32 %v1327, %v1395
    %v1404 = vadd.f32 %v1328, %v1396
    %v1405 = vadd.f32 %v1329, %v1397
    %v1406 = vadd.f32 %v1330, %v1398
    %1407 = vrot.lane.b32.xlu0 %v1299, 16
    %v1408 = vpop.permute.xlu0 %1407
    %1409 = vrot.lane.b32.xlu0 %v1301, 16
    %v1410 = vpop.permute.xlu0 %1409
    %1411 = vrot.lane.b32.xlu0 %v1303, 16
    %v1412 = vpop.permute.xlu0 %1411
    %1413 = vrot.lane.b32.xlu0 %v1305, 16
    %v1414 = vpop.permute.xlu0 %1413
    %1415 = vrot.lane.b32.xlu0 %v1300, 16
    %v1416 = vpop.permute.xlu0 %1415
    %1417 = vrot.lane.b32.xlu0 %v1302, 16
    %v1418 = vpop.permute.xlu0 %1417
    %1419 = vrot.lane.b32.xlu0 %v1304, 16
    %v1420 = vpop.permute.xlu0 %1419
    %1421 = vrot.lane.b32.xlu0 %v1306, 16
    %v1422 = vpop.permute.xlu0 %1421
    %v1423 = vsel %vm318, %v1408, %v1416
    %v1424 = vsel %vm318, %v1410, %v1418
    %v1425 = vsel %vm318, %v1412, %v1420
    %v1426 = vsel %vm318, %v1414, %v1422
    %v1427 = vsel %vm318, %v1416, %v1408
    %v1428 = vsel %vm318, %v1418, %v1410
    %v1429 = vsel %vm318, %v1420, %v1412
    %v1430 = vsel %vm318, %v1422, %v1414
    %v1431 = vld [vmem:[%s327] ss:$8 sm:$0x3]
    %v1433 = vlaneseq
    %v1434 = vshrl.u32 %v1433, 7
    %v1435 = vsub.s32 0, %v1434
    %v1436 = vrot.slane %v1431, %v1435
    %v1437 = vlaneseq
    %v1438 = vshrl.u32 %v1437, 7
    %v1439 = vsub.s32 1, %v1438
    %v1440 = vrot.slane %v1431, %v1439
    %v1443 = vmul.f32 %v1427, %v1436
    %v1444 = vmul.f32 %v1423, %v1440
    %v1445 = vmul.f32 %v1428, %v1436
    %v1446 = vmul.f32 %v1424, %v1440
    %v1447 = vmul.f32 %v1429, %v1436
    %v1448 = vmul.f32 %v1425, %v1440
    %v1449 = vmul.f32 %v1430, %v1436
    %v1450 = vmul.f32 %v1426, %v1440
    %1451 = vset.pattern.permute.xlu0 1
    %1452 = vperm.xlu0 %1451, %v1142
    %v1453 = vpop.permute.xlu0 %1452
    %1455 = vset.pattern.permute.xlu0 1
    %1456 = vperm.xlu0 %1455, %v1143
    %v1457 = vpop.permute.xlu0 %1456
    %1459 = vset.pattern.permute.xlu0 1
    %1460 = vperm.xlu0 %1459, %v1144
    %v1461 = vpop.permute.xlu0 %1460
    %1463 = vset.pattern.permute.xlu0 1
    %1464 = vperm.xlu0 %1463, %v1145
    %v1465 = vpop.permute.xlu0 %1464
    %v1467 = vmul.f32 %v1453, %v1443
    %v1468 = vmul.f32 %v1453, %v1444
    %v1469 = vmul.f32 %v1457, %v1445
    %v1470 = vmul.f32 %v1457, %v1446
    %v1471 = vmul.f32 %v1461, %v1447
    %v1472 = vmul.f32 %v1461, %v1448
    %v1473 = vmul.f32 %v1465, %v1449
    %v1474 = vmul.f32 %v1465, %v1450
    %v1475 = vadd.f32 %v1399, %v1467
    %v1476 = vadd.f32 %v1400, %v1468
    %v1477 = vadd.f32 %v1401, %v1469
    %v1478 = vadd.f32 %v1402, %v1470
    %v1479 = vadd.f32 %v1403, %v1471
    %v1480 = vadd.f32 %v1404, %v1472
    %v1481 = vadd.f32 %v1405, %v1473
    %v1482 = vadd.f32 %v1406, %v1474
    %1483 = vrot.lane.b32.xlu0 %v1299, 15
    %v1484 = vpop.permute.xlu0 %1483
    %1485 = vrot.lane.b32.xlu0 %v1301, 15
    %v1486 = vpop.permute.xlu0 %1485
    %1487 = vrot.lane.b32.xlu0 %v1303, 15
    %v1488 = vpop.permute.xlu0 %1487
    %1489 = vrot.lane.b32.xlu0 %v1305, 15
    %v1490 = vpop.permute.xlu0 %1489
    %1491 = vrot.lane.b32.xlu0 %v1300, 15
    %v1492 = vpop.permute.xlu0 %1491
    %1493 = vrot.lane.b32.xlu0 %v1302, 15
    %v1494 = vpop.permute.xlu0 %1493
    %1495 = vrot.lane.b32.xlu0 %v1304, 15
    %v1496 = vpop.permute.xlu0 %1495
    %1497 = vrot.lane.b32.xlu0 %v1306, 15
    %v1498 = vpop.permute.xlu0 %1497
    %v1499 = vsel %vm396, %v1484, %v1492
    %v1500 = vsel %vm396, %v1486, %v1494
    %v1501 = vsel %vm396, %v1488, %v1496
    %v1502 = vsel %vm396, %v1490, %v1498
    %v1503 = vsel %vm396, %v1492, %v1484
    %v1504 = vsel %vm396, %v1494, %v1486
    %v1505 = vsel %vm396, %v1496, %v1488
    %v1506 = vsel %vm396, %v1498, %v1490
    %v1507 = vld [vmem:[%s405] ss:$8 sm:$0x3]
    %v1509 = vlaneseq
    %v1510 = vshrl.u32 %v1509, 7
    %v1511 = vsub.s32 0, %v1510
    %v1512 = vrot.slane %v1507, %v1511
    %v1513 = vlaneseq
    %v1514 = vshrl.u32 %v1513, 7
    %v1515 = vsub.s32 1, %v1514
    %v1516 = vrot.slane %v1507, %v1515
    %v1519 = vmul.f32 %v1503, %v1512
    %v1520 = vmul.f32 %v1499, %v1516
    %v1521 = vmul.f32 %v1504, %v1512
    %v1522 = vmul.f32 %v1500, %v1516
    %v1523 = vmul.f32 %v1505, %v1512
    %v1524 = vmul.f32 %v1501, %v1516
    %v1525 = vmul.f32 %v1506, %v1512
    %v1526 = vmul.f32 %v1502, %v1516
    %1527 = vset.pattern.permute.xlu0 2
    %1528 = vperm.xlu0 %1527, %v1142
    %v1529 = vpop.permute.xlu0 %1528
    %1531 = vset.pattern.permute.xlu0 2
    %1532 = vperm.xlu0 %1531, %v1143
    %v1533 = vpop.permute.xlu0 %1532
    %1535 = vset.pattern.permute.xlu0 2
    %1536 = vperm.xlu0 %1535, %v1144
    %v1537 = vpop.permute.xlu0 %1536
    %1539 = vset.pattern.permute.xlu0 2
    %1540 = vperm.xlu0 %1539, %v1145
    %v1541 = vpop.permute.xlu0 %1540
    %v1543 = vmul.f32 %v1529, %v1519
    %v1544 = vmul.f32 %v1529, %v1520
    %v1545 = vmul.f32 %v1533, %v1521
    %v1546 = vmul.f32 %v1533, %v1522
    %v1547 = vmul.f32 %v1537, %v1523
    %v1548 = vmul.f32 %v1537, %v1524
    %v1549 = vmul.f32 %v1541, %v1525
    %v1550 = vmul.f32 %v1541, %v1526
    %v1551 = vadd.f32 %v1475, %v1543
    %v1552 = vadd.f32 %v1476, %v1544
    %v1553 = vadd.f32 %v1477, %v1545
    %v1554 = vadd.f32 %v1478, %v1546
    %v1555 = vadd.f32 %v1479, %v1547
    %v1556 = vadd.f32 %v1480, %v1548
    %v1557 = vadd.f32 %v1481, %v1549
    %v1558 = vadd.f32 %v1482, %v1550
    %1559 = vrot.lane.b32.xlu0 %v1299, 1
    %v1560 = vpop.permute.xlu0 %1559
    %1561 = vrot.lane.b32.xlu0 %v1301, 1
    %v1562 = vpop.permute.xlu0 %1561
    %1563 = vrot.lane.b32.xlu0 %v1303, 1
    %v1564 = vpop.permute.xlu0 %1563
    %1565 = vrot.lane.b32.xlu0 %v1305, 1
    %v1566 = vpop.permute.xlu0 %1565
    %1567 = vrot.lane.b32.xlu0 %v1300, 1
    %v1568 = vpop.permute.xlu0 %1567
    %1569 = vrot.lane.b32.xlu0 %v1302, 1
    %v1570 = vpop.permute.xlu0 %1569
    %1571 = vrot.lane.b32.xlu0 %v1304, 1
    %v1572 = vpop.permute.xlu0 %1571
    %1573 = vrot.lane.b32.xlu0 %v1306, 1
    %v1574 = vpop.permute.xlu0 %1573
    %v1575 = vsel %vm474, %v1560, %v1568
    %v1576 = vsel %vm474, %v1562, %v1570
    %v1577 = vsel %vm474, %v1564, %v1572
    %v1578 = vsel %vm474, %v1566, %v1574
    %v1579 = vsel %vm474, %v1568, %v1560
    %v1580 = vsel %vm474, %v1570, %v1562
    %v1581 = vsel %vm474, %v1572, %v1564
    %v1582 = vsel %vm474, %v1574, %v1566
    %v1583 = vld [vmem:[%s483] ss:$8 sm:$0x3]
    %v1585 = vlaneseq
    %v1586 = vshrl.u32 %v1585, 7
    %v1587 = vsub.s32 0, %v1586
    %v1588 = vrot.slane %v1583, %v1587
    %v1589 = vlaneseq
    %v1590 = vshrl.u32 %v1589, 7
    %v1591 = vsub.s32 1, %v1590
    %v1592 = vrot.slane %v1583, %v1591
    %v1595 = vmul.f32 %v1579, %v1588
    %v1596 = vmul.f32 %v1575, %v1592
    %v1597 = vmul.f32 %v1580, %v1588
    %v1598 = vmul.f32 %v1576, %v1592
    %v1599 = vmul.f32 %v1581, %v1588
    %v1600 = vmul.f32 %v1577, %v1592
    %v1601 = vmul.f32 %v1582, %v1588
    %v1602 = vmul.f32 %v1578, %v1592
    %1603 = vset.pattern.permute.xlu0 3
    %1604 = vperm.xlu0 %1603, %v1142
    %v1605 = vpop.permute.xlu0 %1604
    %1607 = vset.pattern.permute.xlu0 3
    %1608 = vperm.xlu0 %1607, %v1143
    %v1609 = vpop.permute.xlu0 %1608
    %1611 = vset.pattern.permute.xlu0 3
    %1612 = vperm.xlu0 %1611, %v1144
    %v1613 = vpop.permute.xlu0 %1612
    %1615 = vset.pattern.permute.xlu0 3
    %1616 = vperm.xlu0 %1615, %v1145
    %v1617 = vpop.permute.xlu0 %1616
    %v1619 = vmul.f32 %v1605, %v1595
    %v1620 = vmul.f32 %v1605, %v1596
    %v1621 = vmul.f32 %v1609, %v1597
    %v1622 = vmul.f32 %v1609, %v1598
    %v1623 = vmul.f32 %v1613, %v1599
    %v1624 = vmul.f32 %v1613, %v1600
    %v1625 = vmul.f32 %v1617, %v1601
    %v1626 = vmul.f32 %v1617, %v1602
    %v1627 = vadd.f32 %v1551, %v1619
    %v1628 = vadd.f32 %v1552, %v1620
    %v1629 = vadd.f32 %v1553, %v1621
    %v1630 = vadd.f32 %v1554, %v1622
    %v1631 = vadd.f32 %v1555, %v1623
    %v1632 = vadd.f32 %v1556, %v1624
    %v1633 = vadd.f32 %v1557, %v1625
    %v1634 = vadd.f32 %v1558, %v1626
    %1635 = vrot.lane.b32.xlu0 %v1299, 127
    %v1636 = vpop.permute.xlu0 %1635
    %1637 = vrot.lane.b32.xlu0 %v1301, 127
    %v1638 = vpop.permute.xlu0 %1637
    %1639 = vrot.lane.b32.xlu0 %v1303, 127
    %v1640 = vpop.permute.xlu0 %1639
    %1641 = vrot.lane.b32.xlu0 %v1305, 127
    %v1642 = vpop.permute.xlu0 %1641
    %1643 = vrot.lane.b32.xlu0 %v1300, 127
    %v1644 = vpop.permute.xlu0 %1643
    %1645 = vrot.lane.b32.xlu0 %v1302, 127
    %v1646 = vpop.permute.xlu0 %1645
    %1647 = vrot.lane.b32.xlu0 %v1304, 127
    %v1648 = vpop.permute.xlu0 %1647
    %1649 = vrot.lane.b32.xlu0 %v1306, 127
    %v1650 = vpop.permute.xlu0 %1649
    %v1651 = vsel %vm552, %v1636, %v1644
    %v1652 = vsel %vm552, %v1638, %v1646
    %v1653 = vsel %vm552, %v1640, %v1648
    %v1654 = vsel %vm552, %v1642, %v1650
    %v1655 = vsel %vm552, %v1644, %v1636
    %v1656 = vsel %vm552, %v1646, %v1638
    %v1657 = vsel %vm552, %v1648, %v1640
    %v1658 = vsel %vm552, %v1650, %v1642
    %v1659 = vld [vmem:[%s561] ss:$8 sm:$0x3]
    %v1661 = vlaneseq
    %v1662 = vshrl.u32 %v1661, 7
    %v1663 = vsub.s32 0, %v1662
    %v1664 = vrot.slane %v1659, %v1663
    %v1665 = vlaneseq
    %v1666 = vshrl.u32 %v1665, 7
    %v1667 = vsub.s32 1, %v1666
    %v1668 = vrot.slane %v1659, %v1667
    %v1671 = vmul.f32 %v1651, %v1664
    %v1672 = vmul.f32 %v1655, %v1668
    %v1673 = vmul.f32 %v1652, %v1664
    %v1674 = vmul.f32 %v1656, %v1668
    %v1675 = vmul.f32 %v1653, %v1664
    %v1676 = vmul.f32 %v1657, %v1668
    %v1677 = vmul.f32 %v1654, %v1664
    %v1678 = vmul.f32 %v1658, %v1668
    %1679 = vset.pattern.permute.xlu0 5
    %1680 = vperm.xlu0 %1679, %v1142
    %v1681 = vpop.permute.xlu0 %1680
    %1683 = vset.pattern.permute.xlu0 5
    %1684 = vperm.xlu0 %1683, %v1143
    %v1685 = vpop.permute.xlu0 %1684
    %1687 = vset.pattern.permute.xlu0 5
    %1688 = vperm.xlu0 %1687, %v1144
    %v1689 = vpop.permute.xlu0 %1688
    %1691 = vset.pattern.permute.xlu0 5
    %1692 = vperm.xlu0 %1691, %v1145
    %v1693 = vpop.permute.xlu0 %1692
    %v1695 = vmul.f32 %v1681, %v1671
    %v1696 = vmul.f32 %v1681, %v1672
    %v1697 = vmul.f32 %v1685, %v1673
    %v1698 = vmul.f32 %v1685, %v1674
    %v1699 = vmul.f32 %v1689, %v1675
    %v1700 = vmul.f32 %v1689, %v1676
    %v1701 = vmul.f32 %v1693, %v1677
    %v1702 = vmul.f32 %v1693, %v1678
    %v1703 = vadd.f32 %v1627, %v1695
    %v1704 = vadd.f32 %v1628, %v1696
    %v1705 = vadd.f32 %v1629, %v1697
    %v1706 = vadd.f32 %v1630, %v1698
    %v1707 = vadd.f32 %v1631, %v1699
    %v1708 = vadd.f32 %v1632, %v1700
    %v1709 = vadd.f32 %v1633, %v1701
    %v1710 = vadd.f32 %v1634, %v1702
    %1711 = vrot.lane.b32.xlu0 %v1299, 113
    %v1712 = vpop.permute.xlu0 %1711
    %1713 = vrot.lane.b32.xlu0 %v1301, 113
    %v1714 = vpop.permute.xlu0 %1713
    %1715 = vrot.lane.b32.xlu0 %v1303, 113
    %v1716 = vpop.permute.xlu0 %1715
    %1717 = vrot.lane.b32.xlu0 %v1305, 113
    %v1718 = vpop.permute.xlu0 %1717
    %1719 = vrot.lane.b32.xlu0 %v1300, 113
    %v1720 = vpop.permute.xlu0 %1719
    %1721 = vrot.lane.b32.xlu0 %v1302, 113
    %v1722 = vpop.permute.xlu0 %1721
    %1723 = vrot.lane.b32.xlu0 %v1304, 113
    %v1724 = vpop.permute.xlu0 %1723
    %1725 = vrot.lane.b32.xlu0 %v1306, 113
    %v1726 = vpop.permute.xlu0 %1725
    %v1727 = vsel %vm630, %v1712, %v1720
    %v1728 = vsel %vm630, %v1714, %v1722
    %v1729 = vsel %vm630, %v1716, %v1724
    %v1730 = vsel %vm630, %v1718, %v1726
    %v1731 = vsel %vm630, %v1720, %v1712
    %v1732 = vsel %vm630, %v1722, %v1714
    %v1733 = vsel %vm630, %v1724, %v1716
    %v1734 = vsel %vm630, %v1726, %v1718
    %v1735 = vld [vmem:[%s639] ss:$8 sm:$0x3]
    %v1737 = vlaneseq
    %v1738 = vshrl.u32 %v1737, 7
    %v1739 = vsub.s32 0, %v1738
    %v1740 = vrot.slane %v1735, %v1739
    %v1741 = vlaneseq
    %v1742 = vshrl.u32 %v1741, 7
    %v1743 = vsub.s32 1, %v1742
    %v1744 = vrot.slane %v1735, %v1743
    %v1747 = vmul.f32 %v1727, %v1740
    %v1748 = vmul.f32 %v1731, %v1744
    %v1749 = vmul.f32 %v1728, %v1740
    %v1750 = vmul.f32 %v1732, %v1744
    %v1751 = vmul.f32 %v1729, %v1740
    %v1752 = vmul.f32 %v1733, %v1744
    %v1753 = vmul.f32 %v1730, %v1740
    %v1754 = vmul.f32 %v1734, %v1744
    %1755 = vset.pattern.permute.xlu0 6
    %1756 = vperm.xlu0 %1755, %v1142
    %v1757 = vpop.permute.xlu0 %1756
    %1759 = vset.pattern.permute.xlu0 6
    %1760 = vperm.xlu0 %1759, %v1143
    %v1761 = vpop.permute.xlu0 %1760
    %1763 = vset.pattern.permute.xlu0 6
    %1764 = vperm.xlu0 %1763, %v1144
    %v1765 = vpop.permute.xlu0 %1764
    %1767 = vset.pattern.permute.xlu0 6
    %1768 = vperm.xlu0 %1767, %v1145
    %v1769 = vpop.permute.xlu0 %1768
    %v1771 = vmul.f32 %v1757, %v1747
    %v1772 = vmul.f32 %v1757, %v1748
    %v1773 = vmul.f32 %v1761, %v1749
    %v1774 = vmul.f32 %v1761, %v1750
    %v1775 = vmul.f32 %v1765, %v1751
    %v1776 = vmul.f32 %v1765, %v1752
    %v1777 = vmul.f32 %v1769, %v1753
    %v1778 = vmul.f32 %v1769, %v1754
    %v1779 = vadd.f32 %v1703, %v1771
    %v1780 = vadd.f32 %v1704, %v1772
    %v1781 = vadd.f32 %v1705, %v1773
    %v1782 = vadd.f32 %v1706, %v1774
    %v1783 = vadd.f32 %v1707, %v1775
    %v1784 = vadd.f32 %v1708, %v1776
    %v1785 = vadd.f32 %v1709, %v1777
    %v1786 = vadd.f32 %v1710, %v1778
    %1787 = vrot.lane.b32.xlu0 %v1299, 112
    %v1788 = vpop.permute.xlu0 %1787
    %1789 = vrot.lane.b32.xlu0 %v1301, 112
    %v1790 = vpop.permute.xlu0 %1789
    %1791 = vrot.lane.b32.xlu0 %v1303, 112
    %v1792 = vpop.permute.xlu0 %1791
    %1793 = vrot.lane.b32.xlu0 %v1305, 112
    %v1794 = vpop.permute.xlu0 %1793
    %1795 = vrot.lane.b32.xlu0 %v1300, 112
    %v1796 = vpop.permute.xlu0 %1795
    %1797 = vrot.lane.b32.xlu0 %v1302, 112
    %v1798 = vpop.permute.xlu0 %1797
    %1799 = vrot.lane.b32.xlu0 %v1304, 112
    %v1800 = vpop.permute.xlu0 %1799
    %1801 = vrot.lane.b32.xlu0 %v1306, 112
    %v1802 = vpop.permute.xlu0 %1801
    %v1803 = vsel %vm708, %v1788, %v1796
    %v1804 = vsel %vm708, %v1790, %v1798
    %v1805 = vsel %vm708, %v1792, %v1800
    %v1806 = vsel %vm708, %v1794, %v1802
    %v1807 = vsel %vm708, %v1796, %v1788
    %v1808 = vsel %vm708, %v1798, %v1790
    %v1809 = vsel %vm708, %v1800, %v1792
    %v1810 = vsel %vm708, %v1802, %v1794
    %v1811 = vld [vmem:[%s717] ss:$8 sm:$0x3]
    %v1813 = vlaneseq
    %v1814 = vshrl.u32 %v1813, 7
    %v1815 = vsub.s32 0, %v1814
    %v1816 = vrot.slane %v1811, %v1815
    %v1817 = vlaneseq
    %v1818 = vshrl.u32 %v1817, 7
    %v1819 = vsub.s32 1, %v1818
    %v1820 = vrot.slane %v1811, %v1819
    %v1823 = vmul.f32 %v1803, %v1816
    %v1824 = vmul.f32 %v1807, %v1820
    %v1825 = vmul.f32 %v1804, %v1816
    %v1826 = vmul.f32 %v1808, %v1820
    %v1827 = vmul.f32 %v1805, %v1816
    %v1828 = vmul.f32 %v1809, %v1820
    %v1829 = vmul.f32 %v1806, %v1816
    %v1830 = vmul.f32 %v1810, %v1820
    %1831 = vset.pattern.permute.xlu0 7
    %1832 = vperm.xlu0 %1831, %v1142
    %v1833 = vpop.permute.xlu0 %1832
    %1835 = vset.pattern.permute.xlu0 7
    %1836 = vperm.xlu0 %1835, %v1143
    %v1837 = vpop.permute.xlu0 %1836
    %1839 = vset.pattern.permute.xlu0 7
    %1840 = vperm.xlu0 %1839, %v1144
    %v1841 = vpop.permute.xlu0 %1840
    %1843 = vset.pattern.permute.xlu0 7
    %1844 = vperm.xlu0 %1843, %v1145
    %v1845 = vpop.permute.xlu0 %1844
    %v1847 = vmul.f32 %v1833, %v1823
    %v1848 = vmul.f32 %v1833, %v1824
    %v1849 = vmul.f32 %v1837, %v1825
    %v1850 = vmul.f32 %v1837, %v1826
    %v1851 = vmul.f32 %v1841, %v1827
    %v1852 = vmul.f32 %v1841, %v1828
    %v1853 = vmul.f32 %v1845, %v1829
    %v1854 = vmul.f32 %v1845, %v1830
    %v1855 = vadd.f32 %v1779, %v1847
    %v1856 = vadd.f32 %v1780, %v1848
    %v1857 = vadd.f32 %v1781, %v1849
    %v1858 = vadd.f32 %v1782, %v1850
    %v1859 = vadd.f32 %v1783, %v1851
    %v1860 = vadd.f32 %v1784, %v1852
    %v1861 = vadd.f32 %v1785, %v1853
    %v1862 = vadd.f32 %v1786, %v1854
    %1863 = vrot.lane.b32.xlu0 %v1299, 111
    %v1864 = vpop.permute.xlu0 %1863
    %1865 = vrot.lane.b32.xlu0 %v1301, 111
    %v1866 = vpop.permute.xlu0 %1865
    %1867 = vrot.lane.b32.xlu0 %v1303, 111
    %v1868 = vpop.permute.xlu0 %1867
    %1869 = vrot.lane.b32.xlu0 %v1305, 111
    %v1870 = vpop.permute.xlu0 %1869
    %1871 = vrot.lane.b32.xlu0 %v1300, 111
    %v1872 = vpop.permute.xlu0 %1871
    %1873 = vrot.lane.b32.xlu0 %v1302, 111
    %v1874 = vpop.permute.xlu0 %1873
    %1875 = vrot.lane.b32.xlu0 %v1304, 111
    %v1876 = vpop.permute.xlu0 %1875
    %1877 = vrot.lane.b32.xlu0 %v1306, 111
    %v1878 = vpop.permute.xlu0 %1877
    %v1879 = vsel %vm786, %v1864, %v1872
    %v1880 = vsel %vm786, %v1866, %v1874
    %v1881 = vsel %vm786, %v1868, %v1876
    %v1882 = vsel %vm786, %v1870, %v1878
    %v1883 = vsel %vm786, %v1872, %v1864
    %v1884 = vsel %vm786, %v1874, %v1866
    %v1885 = vsel %vm786, %v1876, %v1868
    %v1886 = vsel %vm786, %v1878, %v1870
    %v1887 = vld [vmem:[%s795] ss:$8 sm:$0x3]
    %v1889 = vlaneseq
    %v1890 = vshrl.u32 %v1889, 7
    %v1891 = vsub.s32 0, %v1890
    %v1892 = vrot.slane %v1887, %v1891
    %v1893 = vlaneseq
    %v1894 = vshrl.u32 %v1893, 7
    %v1895 = vsub.s32 1, %v1894
    %v1896 = vrot.slane %v1887, %v1895
    %v1899 = vmul.f32 %v1879, %v1892
    %v1900 = vmul.f32 %v1883, %v1896
    %v1901 = vmul.f32 %v1880, %v1892
    %v1902 = vmul.f32 %v1884, %v1896
    %v1903 = vmul.f32 %v1881, %v1892
    %v1904 = vmul.f32 %v1885, %v1896
    %v1905 = vmul.f32 %v1882, %v1892
    %v1906 = vmul.f32 %v1886, %v1896
    %1907 = vset.pattern.permute.xlu0 8
    %1908 = vperm.xlu0 %1907, %v1142
    %v1909 = vpop.permute.xlu0 %1908
    %1911 = vset.pattern.permute.xlu0 8
    %1912 = vperm.xlu0 %1911, %v1143
    %v1913 = vpop.permute.xlu0 %1912
    %1915 = vset.pattern.permute.xlu0 8
    %1916 = vperm.xlu0 %1915, %v1144
    %v1917 = vpop.permute.xlu0 %1916
    %1919 = vset.pattern.permute.xlu0 8
    %1920 = vperm.xlu0 %1919, %v1145
    %v1921 = vpop.permute.xlu0 %1920
    %v1923 = vmul.f32 %v1909, %v1899
    %v1924 = vmul.f32 %v1909, %v1900
    %v1925 = vmul.f32 %v1913, %v1901
    %v1926 = vmul.f32 %v1913, %v1902
    %v1927 = vmul.f32 %v1917, %v1903
    %v1928 = vmul.f32 %v1917, %v1904
    %v1929 = vmul.f32 %v1921, %v1905
    %v1930 = vmul.f32 %v1921, %v1906
    %v1931 = vadd.f32 %v1855, %v1923
    %v1932 = vadd.f32 %v1856, %v1924
    %v1933 = vadd.f32 %v1857, %v1925
    %v1934 = vadd.f32 %v1858, %v1926
    %v1935 = vadd.f32 %v1859, %v1927
    %v1936 = vadd.f32 %v1860, %v1928
    %v1937 = vadd.f32 %v1861, %v1929
    %v1938 = vadd.f32 %v1862, %v1930
    %1939 = vset.pattern.permute.xlu0 10
    %1940 = vperm.xlu0 %1939, %v1142
    %v1941 = vpop.permute.xlu0 %1940
    %1943 = vset.pattern.permute.xlu0 10
    %1944 = vperm.xlu0 %1943, %v1143
    %v1945 = vpop.permute.xlu0 %1944
    %1947 = vset.pattern.permute.xlu0 10
    %1948 = vperm.xlu0 %1947, %v1144
    %v1949 = vpop.permute.xlu0 %1948
    %1951 = vset.pattern.permute.xlu0 10
    %1952 = vperm.xlu0 %1951, %v1145
    %v1953 = vpop.permute.xlu0 %1952
    %v1955 = vadd.f32 %v1931, %v1941
    %v1956 = vadd.f32 %v1932, %v1941
    %v1957 = vadd.f32 %v1933, %v1945
    %v1958 = vadd.f32 %v1934, %v1945
    %v1959 = vadd.f32 %v1935, %v1949
    %v1960 = vadd.f32 %v1936, %v1949
    %v1961 = vadd.f32 %v1937, %v1953
    %v1962 = vadd.f32 %v1938, %v1953
    %v1963 = vmul.f32 %v1955, 0.5
    %v1964 = vmul.f32 %v1956, 0.5
    %v1965 = vmul.f32 %v1957, 0.5
    %v1966 = vmul.f32 %v1958, 0.5
    %v1967 = vmul.f32 %v1959, 0.5
    %v1968 = vmul.f32 %v1960, 0.5
    %v1969 = vmul.f32 %v1961, 0.5
    %v1970 = vmul.f32 %v1962, 0.5
    %v1971 = vtanh.pop %v1963
    %v1972 = vtanh.pop %v1964
    %v1973 = vtanh.pop %v1965
    %v1974 = vtanh.pop %v1966
    %v1975 = vtanh.pop %v1967
    %v1976 = vtanh.pop %v1968
    %v1977 = vtanh.pop %v1969
    %v1978 = vtanh.pop %v1970
    %v1979 = vmul.f32 %v1971, 0.5
    %v1980 = vmul.f32 %v1972, 0.5
    %v1981 = vmul.f32 %v1973, 0.5
    %v1982 = vmul.f32 %v1974, 0.5
    %v1983 = vmul.f32 %v1975, 0.5
    %v1984 = vmul.f32 %v1976, 0.5
    %v1985 = vmul.f32 %v1977, 0.5
    %v1986 = vmul.f32 %v1978, 0.5
    %v1987 = vadd.f32 %v1979, 0.5
    %v1988 = vadd.f32 %v1980, 0.5
    %v1989 = vadd.f32 %v1981, 0.5
    %v1990 = vadd.f32 %v1982, 0.5
    %v1991 = vadd.f32 %v1983, 0.5
    %v1992 = vadd.f32 %v1984, 0.5
    %v1993 = vadd.f32 %v1985, 0.5
    %v1994 = vadd.f32 %v1986, 0.5
    %v1995 = vmul.f32 %v1955, %v1987
    %v1996 = vmul.f32 %v1956, %v1988
    %v1997 = vmul.f32 %v1957, %v1989
    %v1998 = vmul.f32 %v1958, %v1990
    %v1999 = vmul.f32 %v1959, %v1991
    %v2000 = vmul.f32 %v1960, %v1992
    %v2001 = vmul.f32 %v1961, %v1993
    %v2002 = vmul.f32 %v1962, %v1994
    %v2003 = vadd.f32 %v1995, %v1996
    %2004 = vadd.xlane.f32.xlu0 %v2003
    %v2005 = vpop.xlane.xlu0 %2004
    %v2006 = vadd.f32 %v1997, %v1998
    %2007 = vadd.xlane.f32.xlu0 %v2006
    %v2008 = vpop.xlane.xlu0 %2007
    %v2009 = vadd.f32 %v1999, %v2000
    %2010 = vadd.xlane.f32.xlu0 %v2009
    %v2011 = vpop.xlane.xlu0 %2010
    %v2012 = vadd.f32 %v2001, %v2002
    %2013 = vadd.xlane.f32.xlu0 %v2012
    %v2014 = vpop.xlane.xlu0 %2013
    %v2015 = vmul.f32 %v2005, 0.00390625
    %v2016 = vmul.f32 %v2008, 0.00390625
    %v2017 = vmul.f32 %v2011, 0.00390625
    %v2018 = vmul.f32 %v2014, 0.00390625
    %v2019 = vmul.f32 %v1142, %v2015
    %v2020 = vmul.f32 %v1143, %v2016
    %v2021 = vmul.f32 %v1144, %v2017
    %v2022 = vmul.f32 %v1145, %v2018
    %v2023 = vsel %vm932, %v2019, 0.0
    %v2024 = vsel %vm932, %v2020, 0.0
    %v2025 = vadd.f32 %v2023, %v2024
    %v2026 = vsel %vm932, %v2021, 0.0
    %v2027 = vadd.f32 %v2025, %v2026
    %v2028 = vsel %vm932, %v2022, 0.0
    %v2029 = vadd.f32 %v2027, %v2028
    %v2030 = vrot.slane %v2029, 4
    %v2031 = vadd.f32 %v2029, %v2030
    %v2032 = vrot.slane %v2031, 2
    %v2033 = vadd.f32 %v2031, %v2032
    %v2034 = vrot.slane %v2033, 1
    %v2035 = vadd.f32 %v2033, %v2034
    %v2036 = vld [vmem:[%s4] sm:$0x1]
    %v2038 = vlaneseq
    %v2039 = vshrl.u32 %v2038, 7
    %v2040 = vsub.s32 0, %v2039
    %v2041 = vrot.slane %v2036, %v2040
    %2042 = vrot.lane.b32.xlu0 %v2041, 11
    %v2043 = vpop.permute.xlu0 %2042
    %v2045 = vadd.f32 %v2035, %v2043
    %v2046 = vmul.f32 %v2045, 0.5
    %v2047 = vtanh.pop %v2046
    %v2048 = vmul.f32 %v2047, 0.5
    %v2049 = vadd.f32 %v2048, 0.5
    %v2050 = vmul.f32 %v2045, %v2049
    %v2051 = vlaneseq
    %v2052 = vshrl.u32 %v2051, 7
    %v2053 = vsub.s32 0, %v2052
    %v2054 = vrot.slane %v2050, %v2053
    %2056 = vrot.lane.b32.xlu0 %v2054, 2
    %v2057 = vpop.permute.xlu0 %2056
    %v2059 = vmul.f32 %v1142, %v2057
    %v2060 = vmul.f32 %v1143, %v2057
    %v2061 = vmul.f32 %v1144, %v2057
    %v2062 = vmul.f32 %v1145, %v2057
    %2067 = vrot.lane.b32.xlu0 %v2059, 115
    %v2068 = vpop.permute.xlu0 %2067
    %2069 = vrot.lane.b32.xlu0 %v2060, 115
    %v2070 = vpop.permute.xlu0 %2069
    %2071 = vrot.lane.b32.xlu0 %v2061, 115
    %v2072 = vpop.permute.xlu0 %2071
    %2073 = vrot.lane.b32.xlu0 %v2062, 115
    %v2074 = vpop.permute.xlu0 %2073
    %v2079 = vsel %vm989, %v2068, 0.0
    %2080 = vadd.xlane.f32.xlu0 %v2079
    %v2081 = vpop.xlane.xlu0 %2080
    %v2082 = vsel %vm989, %v2070, 0.0
    %2083 = vadd.xlane.f32.xlu0 %v2082
    %v2084 = vpop.xlane.xlu0 %2083
    %v2085 = vsel %vm989, %v2072, 0.0
    %2086 = vadd.xlane.f32.xlu0 %v2085
    %v2087 = vpop.xlane.xlu0 %2086
    %v2088 = vsel %vm989, %v2074, 0.0
    %2089 = vadd.xlane.f32.xlu0 %v2088
    %v2090 = vpop.xlane.xlu0 %2089
    %v2091 = vadd.f32 %v2081, %v1142
    %v2092 = vadd.f32 %v2084, %v1143
    %v2093 = vadd.f32 %v2087, %v1144
    %v2094 = vadd.f32 %v2090, %v1145
    %v2095 = vmul.f32 %v2091, 0.5
    %v2096 = vmul.f32 %v2092, 0.5
    %v2097 = vmul.f32 %v2093, 0.5
    %v2098 = vmul.f32 %v2094, 0.5
    %v2099 = vtanh.pop %v2095
    %v2100 = vtanh.pop %v2096
    %v2101 = vtanh.pop %v2097
    %v2102 = vtanh.pop %v2098
    %v2103 = vmul.f32 %v2099, 0.5
    %v2104 = vmul.f32 %v2100, 0.5
    %v2105 = vmul.f32 %v2101, 0.5
    %v2106 = vmul.f32 %v2102, 0.5
    %v2107 = vadd.f32 %v2103, 0.5
    %v2108 = vadd.f32 %v2104, 0.5
    %v2109 = vadd.f32 %v2105, 0.5
    %v2110 = vadd.f32 %v2106, 0.5
    %2112 = vset.pattern.permute.xlu0 15
    %2113 = vperm.xlu0 %2112, %v2107
    %v2114 = vpop.permute.xlu0 %2113
    %2117 = vset.pattern.permute.xlu0 15
    %2118 = vperm.xlu0 %2117, %v2108
    %v2119 = vpop.permute.xlu0 %2118
    %2122 = vset.pattern.permute.xlu0 15
    %2123 = vperm.xlu0 %2122, %v2109
    %v2124 = vpop.permute.xlu0 %2123
    %2127 = vset.pattern.permute.xlu0 15
    %2128 = vperm.xlu0 %2127, %v2110
    %v2129 = vpop.permute.xlu0 %2128
    %v2131 = vmul.f32 %v1995, %v2114
    %v2132 = vmul.f32 %v1996, %v2114
    %v2133 = vmul.f32 %v1997, %v2119
    %v2134 = vmul.f32 %v1998, %v2119
    %v2135 = vmul.f32 %v1999, %v2124
    %v2136 = vmul.f32 %v2000, %v2124
    %v2137 = vmul.f32 %v2001, %v2129
    %v2138 = vmul.f32 %v2002, %v2129
    %v2139 = vld [vmem:[%s5] sm:$0xff]
    %v2140 = vld [vmem:[%s6] sm:$0xff]
    %2142 = vset.pattern.permute.xlu0 0
    %2143 = vperm.xlu0 %2142, %v2140
    %v2144 = vpop.permute.xlu0 %2143
    %v2147 = vsel %vm1057, %v2139, 0
    %2149 = vmatprep.subr.mxu0 %v2132
    %2150 = vmatpush1.msra.mxu0 %v2131
    %2151 = vmatprep.subr.mxu0 %v2134
    %2152 = vmatpush1.msra.mxu0 %v2133
    %2153 = vmatprep.subr.mxu0 %v2136
    %2154 = vmatpush1.msra.mxu0 %v2135
    %2155 = vmatprep.subr.mxu0 %v2138
    %2156 = vmatpush1.msra.mxu0 %v2137
    %2157 = vmatprep.subr.mxu0 0.0
    %2158 = vmatpush1.msra.mxu0 0.0
    %2159 = vmatprep.subr.mxu0 0.0
    %2160 = vmatpush1.msra.mxu0 0.0
    %2161 = vmatprep.subr.mxu0 0.0
    %2162 = vmatpush1.msra.mxu0 0.0
    %2163 = vmatprep.subr.mxu0 0.0
    %2164 = vmatpush1.msra.mxu0 0.0
    %2165 = vmatprep.subr.mxu0 0.0
    %2166 = vmatpush1.msra.mxu0 0.0
    %2167 = vmatprep.subr.mxu0 0.0
    %2168 = vmatpush1.msra.mxu0 0.0
    %2169 = vmatprep.subr.mxu0 0.0
    %2170 = vmatpush1.msra.mxu0 0.0
    %2171 = vmatprep.subr.mxu0 0.0
    %2172 = vmatpush1.msra.mxu0 0.0
    %2173 = vmatprep.subr.mxu0 0.0
    %2174 = vmatpush1.msra.mxu0 0.0
    %2175 = vmatprep.subr.mxu0 0.0
    %2176 = vmatpush1.msra.mxu0 0.0
    %2177 = vmatprep.subr.mxu0 0.0
    %2178 = vmatpush1.msra.mxu0 0.0
    %2179 = vmatprep.subr.mxu0 0.0
    %2180 = vmatpush1.msra.mxu0 0.0
    %2181 = vmatprep.subr.mxu0 0.0
    %2182 = vmatpush1.msra.mxu0 0.0
    %2183 = vmatprep.subr.mxu0 0.0
    %2184 = vmatpush1.msra.mxu0 0.0
    %2185 = vmatprep.subr.mxu0 0.0
    %2186 = vmatpush1.msra.mxu0 0.0
    %2187 = vmatprep.subr.mxu0 0.0
    %2188 = vmatpush1.msra.mxu0 0.0
    %2189 = vmatprep.subr.mxu0 0.0
    %2190 = vmatpush1.msra.mxu0 0.0
    %2191 = vmatprep.subr.mxu0 0.0
    %2192 = vmatpush1.msra.mxu0 0.0
    %2193 = vmatprep.subr.mxu0 0.0
    %2194 = vmatpush1.msra.mxu0 0.0
    %2195 = vmatprep.subr.mxu0 0.0
    %2196 = vmatpush1.msra.mxu0 0.0
    %2197 = vmatprep.subr.mxu0 0.0
    %2198 = vmatpush1.msra.mxu0 0.0
    %2199 = vmatprep.subr.mxu0 0.0
    %2200 = vmatpush1.msra.mxu0 0.0
    %2201 = vmatprep.subr.mxu0 0.0
    %2202 = vmatpush1.msra.mxu0 0.0
    %2203 = vmatprep.subr.mxu0 0.0
    %2204 = vmatpush1.msra.mxu0 0.0
    %2205 = vmatprep.subr.mxu0 0.0
    %2206 = vmatpush1.msra.mxu0 0.0
    %2207 = vmatprep.subr.mxu0 0.0
    %2208 = vmatpush1.msra.mxu0 0.0
    %2209 = vmatprep.subr.mxu0 0.0
    %2210 = vmatpush1.msra.mxu0 0.0
    %2211 = vmatprep.subr.mxu0 0.0
    %2212 = vmatpush1.msra.mxu0 0.0
    %2213 = vmatprep.mubr.f32.mxu0 0.0
    %2214 = vmatmul.mubr.f32.gmra.mrb[0].mxu0 %v2147
    %v2215 = vpop.f32.mrb[0].mxu0
    %v2216 = vadd.f32 %v2144, %v2215
    %v2217 = vpop.f32.mrb[0].mxu0
    %v2218 = vadd.f32 %v2144, %v2217
    %2219 = vdwg.mxu0
    %v2220 = vadd.f32 %v2216, %v1136
    %v2221 = vadd.f32 %v2218, %v1137
    %2222 = vst [vmem:[#allocation2 + $0x10] sm:$0xff] %v2220
    %2223 = vst [vmem:[#allocation2 + $0x18] sm:$0xff] %v2221
    // Predicated region
    $region30: #{tpu_custom_call.1} parent=1 // pred_check
      _
    $region31: #{tpu_custom_call.1} parent=1 // pred_check_branch
      %2225 = sbr.rel (0) target = $region33
    $region32: #{tpu_custom_call.1} parent=1 // pred_region
      %s2227 = ssub.s32 512, 512
      %2228 = vsyncadd [#allocation3], %s2227
      %s2229 = sshll.u32 [#allocation2], 4
      %s2230 = int_to_ptr.vmem [resolvable:$true] %s2229
      %2235 = dma.vmem_to_hbm [thread:$0]  %s2230, 512, %s7, [#allocation3], 256, 256, 16
    $region33: #{tpu_custom_call.1} parent=1 // pred_fallthru
      _
    // Predicated region
    $region34: #{tpu_custom_call.1} parent=1 // pred_check
      _
    $region35: #{tpu_custom_call.1} parent=1 // pred_check_branch
      %2237 = sbr.rel (0) target = $region37
    $region36: #{tpu_custom_call.1} parent=1 // pred_region
      %2238 = dma.done [#allocation3], 512
    $region37: #{tpu_custom_call.1} parent=1 // pred_fallthru
      _
    %2239 = vsyncpa [#allocation3], 1

</llo_original>
